<compile_context>
chip_gen: v6e
topology: v6e:2x2x1
jax: 0.10.0
libtpu: 0.0.40
codegen_flags: <defaults>
</compile_context>

<pallas_src>
import jax
import jax.numpy as jnp
from jax import lax
from jax.experimental import pallas as pl
from jax.experimental.pallas import tpu as pltpu


# ------------------------------ fused kernel --------------------------------

def bilstm_sentiment_kernel(sent_ref, emb_ref, wihf_ref, whh_ref, bf_ref,
                            wihb_ref, bb_ref, wlf_ref, wlb_ref, bl_ref,
                            out_ref, x_scr, xp_scr):
    SB, _ = x_scr.shape                       # S*B rows, row t*B + b == (t, b)
    S, B, H4 = xp_scr.shape
    H = H4 // 4

    # ---- in-kernel embedding gather (token ids live in SMEM) ----------------
    for r in range(SB):                       # SB static -> unrolled
        tok = sent_ref[r]
        x_scr[pl.ds(r, 1), :] = emb_ref[pl.ds(tok, 1), :]

    # ---- hoisted FORWARD input projection, bias (b_ih+b_hh) folded in -------
    # Only the forward direction needs every timestep; the reverse direction
    # only ever consumes x[S-1].  g-gate columns of W/b are pre-scaled by 2
    # offline for the single-sigmoid activation trick below.
    wihf = wihf_ref[...]                      # (E, 4H) bf16
    bf = bf_ref[...]                          # (1, 4H) f32
    for t in range(S):
        xt = x_scr[pl.ds(t * B, B), :].astype(jnp.bfloat16)
        xp_scr[t] = jnp.dot(xt, wihf, preferred_element_type=jnp.float32) + bf

    def gate_math(gates, c):
        # g-gate pre-activations were scaled by 2 offline, so a single sigmoid
        # pass over the whole (B, 4H) tile gives tanh(g) = 2*sigmoid(2g) - 1
        # via a cheap VPU fixup (halves per-step EUP work on the serial chain).
        lane = lax.broadcasted_iota(jnp.int32, gates.shape, 1)
        is_g = jnp.logical_and(lane >= 2 * H, lane < 3 * H)
        s = jax.nn.sigmoid(gates)
        act = jnp.where(is_g, 2.0 * s - 1.0, s)
        i = act[:, 0:H]
        f = act[:, H:2 * H]
        g = act[:, 2 * H:3 * H]
        o = act[:, 3 * H:4 * H]
        c_new = f * c + i * g
        h_new = o * jnp.tanh(c_new)
        return h_new, c_new

    # ---- forward recurrence: fully unrolled, h/c carried in vregs -----------
    whh = whh_ref[...]                        # (H, 4H) bf16, loaded once
    h = jnp.zeros((B, H), jnp.float32)
    c = jnp.zeros((B, H), jnp.float32)
    for t in range(S):                        # S static -> unrolled at trace
        gates = xp_scr[t] + jnp.dot(h.astype(jnp.bfloat16), whh,
                                    preferred_element_type=jnp.float32)
        h, c = gate_math(gates, c)

    # ---- backward half of lstm_out[-1]: one reverse step on x[S-1] ----------
    # h0 = c0 = 0  =>  the W_hh_reverse term is exactly zero and is omitted.
    x_last = x_scr[pl.ds((S - 1) * B, B), :].astype(jnp.bfloat16)
    gates_b = (jnp.dot(x_last, wihb_ref[...],
                       preferred_element_type=jnp.float32) + bb_ref[...])
    h_b, _ = gate_math(gates_b, jnp.zeros((B, H), jnp.float32))

    # ---- hidden2label + log_softmax(dim=1), no lane concatenate -------------
    logits = (jnp.dot(h.astype(jnp.bfloat16), wlf_ref[...],
                      preferred_element_type=jnp.float32)
              + jnp.dot(h_b.astype(jnp.bfloat16), wlb_ref[...],
                        preferred_element_type=jnp.float32)
              + bl_ref[...])
    m = jnp.max(logits, axis=1, keepdims=True)
    lse = m + jnp.log(jnp.sum(jnp.exp(logits - m), axis=1, keepdims=True))
    out_ref[...] = logits - lse


# -------------------------------- wrapper ------------------------------------

@jax.jit
def bilstm_sentiment_forward(sentence, emb, wih_f, whh, b_f, wih_b, b_b,
                             wl_f, wl_b, bl):
    S, B = sentence.shape
    E = emb.shape[1]
    H = whh.shape[0]
    L = wl_f.shape[1]
    smem = pl.BlockSpec(memory_space=pltpu.MemorySpace.SMEM)
    vmem = pl.BlockSpec(memory_space=pltpu.MemorySpace.VMEM)
    return pl.pallas_call(
        bilstm_sentiment_kernel,
        out_shape=jax.ShapeDtypeStruct((B, L), jnp.float32),
        in_specs=[smem] + [vmem] * 9,
        out_specs=vmem,
        scratch_shapes=[pltpu.VMEM((S * B, E), jnp.float32),     # gathered x
                        pltpu.VMEM((S, B, 4 * H), jnp.float32)],  # fwd gates
    )(sentence.reshape(S * B), emb, wih_f, whh, b_f, wih_b, b_b,
      wl_f, wl_b, bl)


# ----------------------------- parameter setup -------------------------------

def init_raw_params(key, V, E, H, L):
    # TODO(synk): deterministic synthetic init stands in for any checkpoint.
    bound_l = 1.0 / float(H) ** 0.5
    bound_o = 1.0 / float(2 * H) ** 0.5
    ks = jax.random.split(key, 10)

    def u(k, shape, b):
        return jax.random.uniform(k, shape, jnp.float32, -b, b)

    emb = jax.random.normal(ks[0], (V, E), jnp.float32)      # nn.Embedding
    wih_f = u(ks[1], (E, 4 * H), bound_l)                    # (in, out) layout
    whh_f = u(ks[2], (H, 4 * H), bound_l)
    b_f = u(ks[3], (1, 4 * H), bound_l) + u(ks[4], (1, 4 * H), bound_l)
    wih_b = u(ks[5], (E, 4 * H), bound_l)
    # weight_hh_l0_reverse exists in nn.LSTM but only multiplies the zero
    # initial state in the single reverse step lstm_out[-1] depends on.
    b_b = u(ks[6], (1, 4 * H), bound_l) + u(ks[7], (1, 4 * H), bound_l)
    wl = u(ks[8], (2 * H, L), bound_o)                       # hidden2label
    bl = u(ks[9], (1, L), bound_o)
    return dict(emb=emb, wih_f=wih_f, whh_f=whh_f, b_f=b_f,
                wih_b=wih_b, b_b=b_b, wl=wl, bl=bl)


def prepare_kernel_params(raw, H):
    """Offline: scale g-gate columns by 2 (tanh = 2*sigmoid(2x)-1), cast
    matmul operands to bf16, split hidden2label into fwd/bwd halves."""
    def scale_g(w):
        return w.at[..., 2 * H:3 * H].multiply(2.0)

    wih_f = scale_g(raw["wih_f"]).astype(jnp.bfloat16)
    whh_f = scale_g(raw["whh_f"]).astype(jnp.bfloat16)
    b_f = scale_g(raw["b_f"])                                 # f32 bias
    wih_b = scale_g(raw["wih_b"]).astype(jnp.bfloat16)
    b_b = scale_g(raw["b_b"])
    wl_f = raw["wl"][:H, :].astype(jnp.bfloat16)
    wl_b = raw["wl"][H:, :].astype(jnp.bfloat16)
    return (raw["emb"], wih_f, whh_f, b_f, wih_b, b_b, wl_f, wl_b, raw["bl"])


# ---------------------------- pure-JAX reference -----------------------------

def reference_forward(sentence, p):
    S, B = sentence.shape
    H = p["whh_f"].shape[0]
    x = p["emb"][sentence]                                    # (S, B, E)

    def cell(x_t, h, c, wih, whh, b):
        gates = x_t @ wih + h @ whh + b
        i = jax.nn.sigmoid(gates[:, 0:H])
        f = jax.nn.sigmoid(gates[:, H:2 * H])
        g = jnp.tanh(gates[:, 2 * H:3 * H])
        o = jax.nn.sigmoid(gates[:, 3 * H:4 * H])
        c = f * c + i * g
        return o * jnp.tanh(c), c

    h = jnp.zeros((B, H), jnp.float32)
    c = jnp.zeros((B, H), jnp.float32)
    for t in range(S):
        h, c = cell(x[t], h, c, p["wih_f"], p["whh_f"], p["b_f"])
    # backward half of lstm_out[-1] = first reverse step from zero state
    # (weight_hh_l0_reverse multiplies zeros -> omitted).
    hb, _ = cell(x[S - 1], jnp.zeros((B, H), jnp.float32),
                 jnp.zeros((B, H), jnp.float32),
                 p["wih_b"], jnp.zeros((H, 4 * H), jnp.float32), p["b_b"])
    logits = jnp.concatenate([h, hb], axis=1) @ p["wl"] + p["bl"]
    return jax.nn.log_softmax(logits, axis=1)


# ----------------------------------- main ------------------------------------

if __name__ == "__main__":
    E, H, V, L, B, S = 32, 32, 100, 3, 4, 8

    key = jax.random.PRNGKey(0)
    kparams, ksent = jax.random.split(key)

    raw = init_raw_params(kparams, V, E, H, L)
    kernel_params = prepare_kernel_params(raw, H)
    sentence = jax.random.randint(ksent, (S, B), 0, V, dtype=jnp.int32)

    log_probs = bilstm_sentiment_forward(sentence, *kernel_params)
    jax.block_until_ready(log_probs)

    assert log_probs.shape == (B, L)
    # log_softmax rows must sum to 1 in probability space.
    assert bool(jnp.allclose(jnp.sum(jnp.exp(log_probs), axis=1), 1.0,
                             atol=1e-3))
    # Validate against the f32 pure-JAX reference (bf16 operands + the
    # tanh(x)=2*sigmoid(2x)-1 rewrite introduce small drift).
    ref = reference_forward(sentence, raw)
    assert bool(jnp.allclose(log_probs, ref, atol=5e-2, rtol=0.0)), (
        float(jnp.max(jnp.abs(log_probs - ref))))
    print("KERNEL_OK")
</pallas_src>

<mosaic_0001>
module attributes {stable_mosaic.version = 11 : i64} {
  func.func @bilstm_sentiment_kernel(%arg0: memref<32xi32, #tpu.memory_space<smem>>, %arg1: memref<100x32xf32, #tpu.memory_space<vmem>>, %arg2: memref<32x128xbf16, #tpu.memory_space<vmem>>, %arg3: memref<32x128xbf16, #tpu.memory_space<vmem>>, %arg4: memref<1x128xf32, #tpu.memory_space<vmem>>, %arg5: memref<32x128xbf16, #tpu.memory_space<vmem>>, %arg6: memref<1x128xf32, #tpu.memory_space<vmem>>, %arg7: memref<32x3xbf16, #tpu.memory_space<vmem>>, %arg8: memref<32x3xbf16, #tpu.memory_space<vmem>>, %arg9: memref<1x3xf32, #tpu.memory_space<vmem>>, %arg10: memref<4x3xf32, #tpu.memory_space<vmem>>, %arg11: memref<32x32xf32, #tpu.memory_space<vmem>>, %arg12: memref<8x4x128xf32, #tpu.memory_space<vmem>>) attributes {dimension_semantics = [], scalar_prefetch = 0 : i64, scratch_operands = 2 : i64, tpu.core_type = #tpu.core_type<tc>} {
    %c0 = arith.constant 0 : index
    %0 = memref.load %arg0[%c0] : memref<32xi32, #tpu.memory_space<smem>>
    %1 = arith.index_cast %0 : i32 to index
    %c0_0 = arith.constant 0 : index
    %2 = vector.load %arg1[%1, %c0_0] : memref<100x32xf32, #tpu.memory_space<vmem>>, vector<1x32xf32>
    %c0_1 = arith.constant 0 : index
    %c0_2 = arith.constant 0 : index
    %3 = vector.load %arg11[%c0_1, %c0_2] : memref<32x32xf32, #tpu.memory_space<vmem>>, vector<1x32xf32>
    tpu.vector_store %arg11[%c0_1, %c0_2], %2 {strides = array<i32>} : memref<32x32xf32, #tpu.memory_space<vmem>>, vector<1x32xf32>,
    %c1 = arith.constant 1 : index
    %4 = memref.load %arg0[%c1] : memref<32xi32, #tpu.memory_space<smem>>
    %5 = arith.index_cast %4 : i32 to index
    %c0_3 = arith.constant 0 : index
    %6 = vector.load %arg1[%5, %c0_3] : memref<100x32xf32, #tpu.memory_space<vmem>>, vector<1x32xf32>
    %c1_4 = arith.constant 1 : index
    %c0_5 = arith.constant 0 : index
    %7 = vector.load %arg11[%c1_4, %c0_5] : memref<32x32xf32, #tpu.memory_space<vmem>>, vector<1x32xf32>
    tpu.vector_store %arg11[%c1_4, %c0_5], %6 {strides = array<i32>} : memref<32x32xf32, #tpu.memory_space<vmem>>, vector<1x32xf32>,
    %c2 = arith.constant 2 : index
    %8 = memref.load %arg0[%c2] : memref<32xi32, #tpu.memory_space<smem>>
    %9 = arith.index_cast %8 : i32 to index
    %c0_6 = arith.constant 0 : index
    %10 = vector.load %arg1[%9, %c0_6] : memref<100x32xf32, #tpu.memory_space<vmem>>, vector<1x32xf32>
    %c2_7 = arith.constant 2 : index
    %c0_8 = arith.constant 0 : index
    %11 = vector.load %arg11[%c2_7, %c0_8] : memref<32x32xf32, #tpu.memory_space<vmem>>, vector<1x32xf32>
    tpu.vector_store %arg11[%c2_7, %c0_8], %10 {strides = array<i32>} : memref<32x32xf32, #tpu.memory_space<vmem>>, vector<1x32xf32>,
    %c3 = arith.constant 3 : index
    %12 = memref.load %arg0[%c3] : memref<32xi32, #tpu.memory_space<smem>>
    %13 = arith.index_cast %12 : i32 to index
    %c0_9 = arith.constant 0 : index
    %14 = vector.load %arg1[%13, %c0_9] : memref<100x32xf32, #tpu.memory_space<vmem>>, vector<1x32xf32>
    %c3_10 = arith.constant 3 : index
    %c0_11 = arith.constant 0 : index
    %15 = vector.load %arg11[%c3_10, %c0_11] : memref<32x32xf32, #tpu.memory_space<vmem>>, vector<1x32xf32>
    tpu.vector_store %arg11[%c3_10, %c0_11], %14 {strides = array<i32>} : memref<32x32xf32, #tpu.memory_space<vmem>>, vector<1x32xf32>,
    %c4 = arith.constant 4 : index
    %16 = memref.load %arg0[%c4] : memref<32xi32, #tpu.memory_space<smem>>
    %17 = arith.index_cast %16 : i32 to index
    %c0_12 = arith.constant 0 : index
    %18 = vector.load %arg1[%17, %c0_12] : memref<100x32xf32, #tpu.memory_space<vmem>>, vector<1x32xf32>
    %c4_13 = arith.constant 4 : index
    %c0_14 = arith.constant 0 : index
    %19 = vector.load %arg11[%c4_13, %c0_14] : memref<32x32xf32, #tpu.memory_space<vmem>>, vector<1x32xf32>
    tpu.vector_store %arg11[%c4_13, %c0_14], %18 {strides = array<i32>} : memref<32x32xf32, #tpu.memory_space<vmem>>, vector<1x32xf32>,
    %c5 = arith.constant 5 : index
    %20 = memref.load %arg0[%c5] : memref<32xi32, #tpu.memory_space<smem>>
    %21 = arith.index_cast %20 : i32 to index
    %c0_15 = arith.constant 0 : index
    %22 = vector.load %arg1[%21, %c0_15] : memref<100x32xf32, #tpu.memory_space<vmem>>, vector<1x32xf32>
    %c5_16 = arith.constant 5 : index
    %c0_17 = arith.constant 0 : index
    %23 = vector.load %arg11[%c5_16, %c0_17] : memref<32x32xf32, #tpu.memory_space<vmem>>, vector<1x32xf32>
    tpu.vector_store %arg11[%c5_16, %c0_17], %22 {strides = array<i32>} : memref<32x32xf32, #tpu.memory_space<vmem>>, vector<1x32xf32>,
    %c6 = arith.constant 6 : index
    %24 = memref.load %arg0[%c6] : memref<32xi32, #tpu.memory_space<smem>>
    %25 = arith.index_cast %24 : i32 to index
    %c0_18 = arith.constant 0 : index
    %26 = vector.load %arg1[%25, %c0_18] : memref<100x32xf32, #tpu.memory_space<vmem>>, vector<1x32xf32>
    %c6_19 = arith.constant 6 : index
    %c0_20 = arith.constant 0 : index
    %27 = vector.load %arg11[%c6_19, %c0_20] : memref<32x32xf32, #tpu.memory_space<vmem>>, vector<1x32xf32>
    tpu.vector_store %arg11[%c6_19, %c0_20], %26 {strides = array<i32>} : memref<32x32xf32, #tpu.memory_space<vmem>>, vector<1x32xf32>,
    %c7 = arith.constant 7 : index
    %28 = memref.load %arg0[%c7] : memref<32xi32, #tpu.memory_space<smem>>
    %29 = arith.index_cast %28 : i32 to index
    %c0_21 = arith.constant 0 : index
    %30 = vector.load %arg1[%29, %c0_21] : memref<100x32xf32, #tpu.memory_space<vmem>>, vector<1x32xf32>
    %c7_22 = arith.constant 7 : index
    %c0_23 = arith.constant 0 : index
    %31 = vector.load %arg11[%c7_22, %c0_23] : memref<32x32xf32, #tpu.memory_space<vmem>>, vector<1x32xf32>
    tpu.vector_store %arg11[%c7_22, %c0_23], %30 {strides = array<i32>} : memref<32x32xf32, #tpu.memory_space<vmem>>, vector<1x32xf32>,
    %c8 = arith.constant 8 : index
    %32 = memref.load %arg0[%c8] : memref<32xi32, #tpu.memory_space<smem>>
    %33 = arith.index_cast %32 : i32 to index
    %c0_24 = arith.constant 0 : index
    %34 = vector.load %arg1[%33, %c0_24] : memref<100x32xf32, #tpu.memory_space<vmem>>, vector<1x32xf32>
    %c8_25 = arith.constant 8 : index
    %c0_26 = arith.constant 0 : index
    %35 = vector.load %arg11[%c8_25, %c0_26] : memref<32x32xf32, #tpu.memory_space<vmem>>, vector<1x32xf32>
    tpu.vector_store %arg11[%c8_25, %c0_26], %34 {strides = array<i32>} : memref<32x32xf32, #tpu.memory_space<vmem>>, vector<1x32xf32>,
    %c9 = arith.constant 9 : index
    %36 = memref.load %arg0[%c9] : memref<32xi32, #tpu.memory_space<smem>>
    %37 = arith.index_cast %36 : i32 to index
    %c0_27 = arith.constant 0 : index
    %38 = vector.load %arg1[%37, %c0_27] : memref<100x32xf32, #tpu.memory_space<vmem>>, vector<1x32xf32>
    %c9_28 = arith.constant 9 : index
    %c0_29 = arith.constant 0 : index
    %39 = vector.load %arg11[%c9_28, %c0_29] : memref<32x32xf32, #tpu.memory_space<vmem>>, vector<1x32xf32>
    tpu.vector_store %arg11[%c9_28, %c0_29], %38 {strides = array<i32>} : memref<32x32xf32, #tpu.memory_space<vmem>>, vector<1x32xf32>,
    %c10 = arith.constant 10 : index
    %40 = memref.load %arg0[%c10] : memref<32xi32, #tpu.memory_space<smem>>
    %41 = arith.index_cast %40 : i32 to index
    %c0_30 = arith.constant 0 : index
    %42 = vector.load %arg1[%41, %c0_30] : memref<100x32xf32, #tpu.memory_space<vmem>>, vector<1x32xf32>
    %c10_31 = arith.constant 10 : index
    %c0_32 = arith.constant 0 : index
    %43 = vector.load %arg11[%c10_31, %c0_32] : memref<32x32xf32, #tpu.memory_space<vmem>>, vector<1x32xf32>
    tpu.vector_store %arg11[%c10_31, %c0_32], %42 {strides = array<i32>} : memref<32x32xf32, #tpu.memory_space<vmem>>, vector<1x32xf32>,
    %c11 = arith.constant 11 : index
    %44 = memref.load %arg0[%c11] : memref<32xi32, #tpu.memory_space<smem>>
    %45 = arith.index_cast %44 : i32 to index
    %c0_33 = arith.constant 0 : index
    %46 = vector.load %arg1[%45, %c0_33] : memref<100x32xf32, #tpu.memory_space<vmem>>, vector<1x32xf32>
    %c11_34 = arith.constant 11 : index
    %c0_35 = arith.constant 0 : index
    %47 = vector.load %arg11[%c11_34, %c0_35] : memref<32x32xf32, #tpu.memory_space<vmem>>, vector<1x32xf32>
    tpu.vector_store %arg11[%c11_34, %c0_35], %46 {strides = array<i32>} : memref<32x32xf32, #tpu.memory_space<vmem>>, vector<1x32xf32>,
    %c12 = arith.constant 12 : index
    %48 = memref.load %arg0[%c12] : memref<32xi32, #tpu.memory_space<smem>>
    %49 = arith.index_cast %48 : i32 to index
    %c0_36 = arith.constant 0 : index
    %50 = vector.load %arg1[%49, %c0_36] : memref<100x32xf32, #tpu.memory_space<vmem>>, vector<1x32xf32>
    %c12_37 = arith.constant 12 : index
    %c0_38 = arith.constant 0 : index
    %51 = vector.load %arg11[%c12_37, %c0_38] : memref<32x32xf32, #tpu.memory_space<vmem>>, vector<1x32xf32>
    tpu.vector_store %arg11[%c12_37, %c0_38], %50 {strides = array<i32>} : memref<32x32xf32, #tpu.memory_space<vmem>>, vector<1x32xf32>,
    %c13 = arith.constant 13 : index
    %52 = memref.load %arg0[%c13] : memref<32xi32, #tpu.memory_space<smem>>
    %53 = arith.index_cast %52 : i32 to index
    %c0_39 = arith.constant 0 : index
    %54 = vector.load %arg1[%53, %c0_39] : memref<100x32xf32, #tpu.memory_space<vmem>>, vector<1x32xf32>
    %c13_40 = arith.constant 13 : index
    %c0_41 = arith.constant 0 : index
    %55 = vector.load %arg11[%c13_40, %c0_41] : memref<32x32xf32, #tpu.memory_space<vmem>>, vector<1x32xf32>
    tpu.vector_store %arg11[%c13_40, %c0_41], %54 {strides = array<i32>} : memref<32x32xf32, #tpu.memory_space<vmem>>, vector<1x32xf32>,
    %c14 = arith.constant 14 : index
    %56 = memref.load %arg0[%c14] : memref<32xi32, #tpu.memory_space<smem>>
    %57 = arith.index_cast %56 : i32 to index
    %c0_42 = arith.constant 0 : index
    %58 = vector.load %arg1[%57, %c0_42] : memref<100x32xf32, #tpu.memory_space<vmem>>, vector<1x32xf32>
    %c14_43 = arith.constant 14 : index
    %c0_44 = arith.constant 0 : index
    %59 = vector.load %arg11[%c14_43, %c0_44] : memref<32x32xf32, #tpu.memory_space<vmem>>, vector<1x32xf32>
    tpu.vector_store %arg11[%c14_43, %c0_44], %58 {strides = array<i32>} : memref<32x32xf32, #tpu.memory_space<vmem>>, vector<1x32xf32>,
    %c15 = arith.constant 15 : index
    %60 = memref.load %arg0[%c15] : memref<32xi32, #tpu.memory_space<smem>>
    %61 = arith.index_cast %60 : i32 to index
    %c0_45 = arith.constant 0 : index
    %62 = vector.load %arg1[%61, %c0_45] : memref<100x32xf32, #tpu.memory_space<vmem>>, vector<1x32xf32>
    %c15_46 = arith.constant 15 : index
    %c0_47 = arith.constant 0 : index
    %63 = vector.load %arg11[%c15_46, %c0_47] : memref<32x32xf32, #tpu.memory_space<vmem>>, vector<1x32xf32>
    tpu.vector_store %arg11[%c15_46, %c0_47], %62 {strides = array<i32>} : memref<32x32xf32, #tpu.memory_space<vmem>>, vector<1x32xf32>,
    %c16 = arith.constant 16 : index
    %64 = memref.load %arg0[%c16] : memref<32xi32, #tpu.memory_space<smem>>
    %65 = arith.index_cast %64 : i32 to index
    %c0_48 = arith.constant 0 : index
    %66 = vector.load %arg1[%65, %c0_48] : memref<100x32xf32, #tpu.memory_space<vmem>>, vector<1x32xf32>
    %c16_49 = arith.constant 16 : index
    %c0_50 = arith.constant 0 : index
    %67 = vector.load %arg11[%c16_49, %c0_50] : memref<32x32xf32, #tpu.memory_space<vmem>>, vector<1x32xf32>
    tpu.vector_store %arg11[%c16_49, %c0_50], %66 {strides = array<i32>} : memref<32x32xf32, #tpu.memory_space<vmem>>, vector<1x32xf32>,
    %c17 = arith.constant 17 : index
    %68 = memref.load %arg0[%c17] : memref<32xi32, #tpu.memory_space<smem>>
    %69 = arith.index_cast %68 : i32 to index
    %c0_51 = arith.constant 0 : index
    %70 = vector.load %arg1[%69, %c0_51] : memref<100x32xf32, #tpu.memory_space<vmem>>, vector<1x32xf32>
    %c17_52 = arith.constant 17 : index
    %c0_53 = arith.constant 0 : index
    %71 = vector.load %arg11[%c17_52, %c0_53] : memref<32x32xf32, #tpu.memory_space<vmem>>, vector<1x32xf32>
    tpu.vector_store %arg11[%c17_52, %c0_53], %70 {strides = array<i32>} : memref<32x32xf32, #tpu.memory_space<vmem>>, vector<1x32xf32>,
    %c18 = arith.constant 18 : index
    %72 = memref.load %arg0[%c18] : memref<32xi32, #tpu.memory_space<smem>>
    %73 = arith.index_cast %72 : i32 to index
    %c0_54 = arith.constant 0 : index
    %74 = vector.load %arg1[%73, %c0_54] : memref<100x32xf32, #tpu.memory_space<vmem>>, vector<1x32xf32>
    %c18_55 = arith.constant 18 : index
    %c0_56 = arith.constant 0 : index
    %75 = vector.load %arg11[%c18_55, %c0_56] : memref<32x32xf32, #tpu.memory_space<vmem>>, vector<1x32xf32>
    tpu.vector_store %arg11[%c18_55, %c0_56], %74 {strides = array<i32>} : memref<32x32xf32, #tpu.memory_space<vmem>>, vector<1x32xf32>,
    %c19 = arith.constant 19 : index
    %76 = memref.load %arg0[%c19] : memref<32xi32, #tpu.memory_space<smem>>
    %77 = arith.index_cast %76 : i32 to index
    %c0_57 = arith.constant 0 : index
    %78 = vector.load %arg1[%77, %c0_57] : memref<100x32xf32, #tpu.memory_space<vmem>>, vector<1x32xf32>
    %c19_58 = arith.constant 19 : index
    %c0_59 = arith.constant 0 : index
    %79 = vector.load %arg11[%c19_58, %c0_59] : memref<32x32xf32, #tpu.memory_space<vmem>>, vector<1x32xf32>
    tpu.vector_store %arg11[%c19_58, %c0_59], %78 {strides = array<i32>} : memref<32x32xf32, #tpu.memory_space<vmem>>, vector<1x32xf32>,
    %c20 = arith.constant 20 : index
    %80 = memref.load %arg0[%c20] : memref<32xi32, #tpu.memory_space<smem>>
    %81 = arith.index_cast %80 : i32 to index
    %c0_60 = arith.constant 0 : index
    %82 = vector.load %arg1[%81, %c0_60] : memref<100x32xf32, #tpu.memory_space<vmem>>, vector<1x32xf32>
    %c20_61 = arith.constant 20 : index
    %c0_62 = arith.constant 0 : index
    %83 = vector.load %arg11[%c20_61, %c0_62] : memref<32x32xf32, #tpu.memory_space<vmem>>, vector<1x32xf32>
    tpu.vector_store %arg11[%c20_61, %c0_62], %82 {strides = array<i32>} : memref<32x32xf32, #tpu.memory_space<vmem>>, vector<1x32xf32>,
    %c21 = arith.constant 21 : index
    %84 = memref.load %arg0[%c21] : memref<32xi32, #tpu.memory_space<smem>>
    %85 = arith.index_cast %84 : i32 to index
    %c0_63 = arith.constant 0 : index
    %86 = vector.load %arg1[%85, %c0_63] : memref<100x32xf32, #tpu.memory_space<vmem>>, vector<1x32xf32>
    %c21_64 = arith.constant 21 : index
    %c0_65 = arith.constant 0 : index
    %87 = vector.load %arg11[%c21_64, %c0_65] : memref<32x32xf32, #tpu.memory_space<vmem>>, vector<1x32xf32>
    tpu.vector_store %arg11[%c21_64, %c0_65], %86 {strides = array<i32>} : memref<32x32xf32, #tpu.memory_space<vmem>>, vector<1x32xf32>,
    %c22 = arith.constant 22 : index
    %88 = memref.load %arg0[%c22] : memref<32xi32, #tpu.memory_space<smem>>
    %89 = arith.index_cast %88 : i32 to index
    %c0_66 = arith.constant 0 : index
    %90 = vector.load %arg1[%89, %c0_66] : memref<100x32xf32, #tpu.memory_space<vmem>>, vector<1x32xf32>
    %c22_67 = arith.constant 22 : index
    %c0_68 = arith.constant 0 : index
    %91 = vector.load %arg11[%c22_67, %c0_68] : memref<32x32xf32, #tpu.memory_space<vmem>>, vector<1x32xf32>
    tpu.vector_store %arg11[%c22_67, %c0_68], %90 {strides = array<i32>} : memref<32x32xf32, #tpu.memory_space<vmem>>, vector<1x32xf32>,
    %c23 = arith.constant 23 : index
    %92 = memref.load %arg0[%c23] : memref<32xi32, #tpu.memory_space<smem>>
    %93 = arith.index_cast %92 : i32 to index
    %c0_69 = arith.constant 0 : index
    %94 = vector.load %arg1[%93, %c0_69] : memref<100x32xf32, #tpu.memory_space<vmem>>, vector<1x32xf32>
    %c23_70 = arith.constant 23 : index
    %c0_71 = arith.constant 0 : index
    %95 = vector.load %arg11[%c23_70, %c0_71] : memref<32x32xf32, #tpu.memory_space<vmem>>, vector<1x32xf32>
    tpu.vector_store %arg11[%c23_70, %c0_71], %94 {strides = array<i32>} : memref<32x32xf32, #tpu.memory_space<vmem>>, vector<1x32xf32>,
    %c24 = arith.constant 24 : index
    %96 = memref.load %arg0[%c24] : memref<32xi32, #tpu.memory_space<smem>>
    %97 = arith.index_cast %96 : i32 to index
    %c0_72 = arith.constant 0 : index
    %98 = vector.load %arg1[%97, %c0_72] : memref<100x32xf32, #tpu.memory_space<vmem>>, vector<1x32xf32>
    %c24_73 = arith.constant 24 : index
    %c0_74 = arith.constant 0 : index
    %99 = vector.load %arg11[%c24_73, %c0_74] : memref<32x32xf32, #tpu.memory_space<vmem>>, vector<1x32xf32>
    tpu.vector_store %arg11[%c24_73, %c0_74], %98 {strides = array<i32>} : memref<32x32xf32, #tpu.memory_space<vmem>>, vector<1x32xf32>,
    %c25 = arith.constant 25 : index
    %100 = memref.load %arg0[%c25] : memref<32xi32, #tpu.memory_space<smem>>
    %101 = arith.index_cast %100 : i32 to index
    %c0_75 = arith.constant 0 : index
    %102 = vector.load %arg1[%101, %c0_75] : memref<100x32xf32, #tpu.memory_space<vmem>>, vector<1x32xf32>
    %c25_76 = arith.constant 25 : index
    %c0_77 = arith.constant 0 : index
    %103 = vector.load %arg11[%c25_76, %c0_77] : memref<32x32xf32, #tpu.memory_space<vmem>>, vector<1x32xf32>
    tpu.vector_store %arg11[%c25_76, %c0_77], %102 {strides = array<i32>} : memref<32x32xf32, #tpu.memory_space<vmem>>, vector<1x32xf32>,
    %c26 = arith.constant 26 : index
    %104 = memref.load %arg0[%c26] : memref<32xi32, #tpu.memory_space<smem>>
    %105 = arith.index_cast %104 : i32 to index
    %c0_78 = arith.constant 0 : index
    %106 = vector.load %arg1[%105, %c0_78] : memref<100x32xf32, #tpu.memory_space<vmem>>, vector<1x32xf32>
    %c26_79 = arith.constant 26 : index
    %c0_80 = arith.constant 0 : index
    %107 = vector.load %arg11[%c26_79, %c0_80] : memref<32x32xf32, #tpu.memory_space<vmem>>, vector<1x32xf32>
    tpu.vector_store %arg11[%c26_79, %c0_80], %106 {strides = array<i32>} : memref<32x32xf32, #tpu.memory_space<vmem>>, vector<1x32xf32>,
    %c27 = arith.constant 27 : index
    %108 = memref.load %arg0[%c27] : memref<32xi32, #tpu.memory_space<smem>>
    %109 = arith.index_cast %108 : i32 to index
    %c0_81 = arith.constant 0 : index
    %110 = vector.load %arg1[%109, %c0_81] : memref<100x32xf32, #tpu.memory_space<vmem>>, vector<1x32xf32>
    %c27_82 = arith.constant 27 : index
    %c0_83 = arith.constant 0 : index
    %111 = vector.load %arg11[%c27_82, %c0_83] : memref<32x32xf32, #tpu.memory_space<vmem>>, vector<1x32xf32>
    tpu.vector_store %arg11[%c27_82, %c0_83], %110 {strides = array<i32>} : memref<32x32xf32, #tpu.memory_space<vmem>>, vector<1x32xf32>,
    %c28 = arith.constant 28 : index
    %112 = memref.load %arg0[%c28] : memref<32xi32, #tpu.memory_space<smem>>
    %113 = arith.index_cast %112 : i32 to index
    %c0_84 = arith.constant 0 : index
    %114 = vector.load %arg1[%113, %c0_84] : memref<100x32xf32, #tpu.memory_space<vmem>>, vector<1x32xf32>
    %c28_85 = arith.constant 28 : index
    %c0_86 = arith.constant 0 : index
    %115 = vector.load %arg11[%c28_85, %c0_86] : memref<32x32xf32, #tpu.memory_space<vmem>>, vector<1x32xf32>
    tpu.vector_store %arg11[%c28_85, %c0_86], %114 {strides = array<i32>} : memref<32x32xf32, #tpu.memory_space<vmem>>, vector<1x32xf32>,
    %c29 = arith.constant 29 : index
    %116 = memref.load %arg0[%c29] : memref<32xi32, #tpu.memory_space<smem>>
    %117 = arith.index_cast %116 : i32 to index
    %c0_87 = arith.constant 0 : index
    %118 = vector.load %arg1[%117, %c0_87] : memref<100x32xf32, #tpu.memory_space<vmem>>, vector<1x32xf32>
    %c29_88 = arith.constant 29 : index
    %c0_89 = arith.constant 0 : index
    %119 = vector.load %arg11[%c29_88, %c0_89] : memref<32x32xf32, #tpu.memory_space<vmem>>, vector<1x32xf32>
    tpu.vector_store %arg11[%c29_88, %c0_89], %118 {strides = array<i32>} : memref<32x32xf32, #tpu.memory_space<vmem>>, vector<1x32xf32>,
    %c30 = arith.constant 30 : index
    %120 = memref.load %arg0[%c30] : memref<32xi32, #tpu.memory_space<smem>>
    %121 = arith.index_cast %120 : i32 to index
    %c0_90 = arith.constant 0 : index
    %122 = vector.load %arg1[%121, %c0_90] : memref<100x32xf32, #tpu.memory_space<vmem>>, vector<1x32xf32>
    %c30_91 = arith.constant 30 : index
    %c0_92 = arith.constant 0 : index
    %123 = vector.load %arg11[%c30_91, %c0_92] : memref<32x32xf32, #tpu.memory_space<vmem>>, vector<1x32xf32>
    tpu.vector_store %arg11[%c30_91, %c0_92], %122 {strides = array<i32>} : memref<32x32xf32, #tpu.memory_space<vmem>>, vector<1x32xf32>,
    %c31 = arith.constant 31 : index
    %124 = memref.load %arg0[%c31] : memref<32xi32, #tpu.memory_space<smem>>
    %125 = arith.index_cast %124 : i32 to index
    %c0_93 = arith.constant 0 : index
    %126 = vector.load %arg1[%125, %c0_93] : memref<100x32xf32, #tpu.memory_space<vmem>>, vector<1x32xf32>
    %c31_94 = arith.constant 31 : index
    %c0_95 = arith.constant 0 : index
    %127 = vector.load %arg11[%c31_94, %c0_95] : memref<32x32xf32, #tpu.memory_space<vmem>>, vector<1x32xf32>
    tpu.vector_store %arg11[%c31_94, %c0_95], %126 {strides = array<i32>} : memref<32x32xf32, #tpu.memory_space<vmem>>, vector<1x32xf32>,
    %c0_96 = arith.constant 0 : index
    %c0_97 = arith.constant 0 : index
    %128 = vector.load %arg2[%c0_96, %c0_97] : memref<32x128xbf16, #tpu.memory_space<vmem>>, vector<32x128xbf16>
    %c0_98 = arith.constant 0 : index
    %c0_99 = arith.constant 0 : index
    %129 = vector.load %arg4[%c0_98, %c0_99] : memref<1x128xf32, #tpu.memory_space<vmem>>, vector<1x128xf32>
    %c0_100 = arith.constant 0 : index
    %c0_101 = arith.constant 0 : index
    %130 = vector.load %arg11[%c0_100, %c0_101] : memref<32x32xf32, #tpu.memory_space<vmem>>, vector<4x32xf32>
    %131 = arith.truncf %130 : vector<4x32xf32> to vector<4x32xbf16>
    %cst = arith.constant dense<0.000000e+00> : vector<4x128xf32>
    %132 = tpu.matmul %131, %128, %cst {dimension_numbers = #tpu.dot_dimension_numbers<[1], [0], [0], [1], [0, 0, 1, 1], [], []>} : vector<4x32xbf16>, vector<32x128xbf16>, vector<4x128xf32> -> vector<4x128xf32>
    %133 = vector.broadcast %129 : vector<1x128xf32> to vector<4x128xf32>
    %134 = arith.addf %132, %133 : vector<4x128xf32>
    %c0_102 = arith.constant 0 : index
    %c0_103 = arith.constant 0 : index
    %c0_104 = arith.constant 0 : index
    %135 = vector.load %arg12[%c0_102, %c0_103, %c0_104] : memref<8x4x128xf32, #tpu.memory_space<vmem>>, vector<1x4x128xf32>
    %136 = vector.shape_cast %135 : vector<1x4x128xf32> to vector<4x128xf32>
    %137 = vector.shape_cast %134 : vector<4x128xf32> to vector<1x4x128xf32>
    tpu.vector_store %arg12[%c0_102, %c0_103, %c0_104], %137 {strides = array<i32>} : memref<8x4x128xf32, #tpu.memory_space<vmem>>, vector<1x4x128xf32>,
    %c4_105 = arith.constant 4 : index
    %c0_106 = arith.constant 0 : index
    %138 = vector.load %arg11[%c4_105, %c0_106] : memref<32x32xf32, #tpu.memory_space<vmem>>, vector<4x32xf32>
    %139 = arith.truncf %138 : vector<4x32xf32> to vector<4x32xbf16>
    %cst_107 = arith.constant dense<0.000000e+00> : vector<4x128xf32>
    %140 = tpu.matmul %139, %128, %cst_107 {dimension_numbers = #tpu.dot_dimension_numbers<[1], [0], [0], [1], [0, 0, 1, 1], [], []>} : vector<4x32xbf16>, vector<32x128xbf16>, vector<4x128xf32> -> vector<4x128xf32>
    %141 = vector.broadcast %129 : vector<1x128xf32> to vector<4x128xf32>
    %142 = arith.addf %140, %141 : vector<4x128xf32>
    %c1_108 = arith.constant 1 : index
    %c0_109 = arith.constant 0 : index
    %c0_110 = arith.constant 0 : index
    %143 = vector.load %arg12[%c1_108, %c0_109, %c0_110] : memref<8x4x128xf32, #tpu.memory_space<vmem>>, vector<1x4x128xf32>
    %144 = vector.shape_cast %143 : vector<1x4x128xf32> to vector<4x128xf32>
    %145 = vector.shape_cast %142 : vector<4x128xf32> to vector<1x4x128xf32>
    tpu.vector_store %arg12[%c1_108, %c0_109, %c0_110], %145 {strides = array<i32>} : memref<8x4x128xf32, #tpu.memory_space<vmem>>, vector<1x4x128xf32>,
    %c8_111 = arith.constant 8 : index
    %c0_112 = arith.constant 0 : index
    %146 = vector.load %arg11[%c8_111, %c0_112] : memref<32x32xf32, #tpu.memory_space<vmem>>, vector<4x32xf32>
    %147 = arith.truncf %146 : vector<4x32xf32> to vector<4x32xbf16>
    %cst_113 = arith.constant dense<0.000000e+00> : vector<4x128xf32>
    %148 = tpu.matmul %147, %128, %cst_113 {dimension_numbers = #tpu.dot_dimension_numbers<[1], [0], [0], [1], [0, 0, 1, 1], [], []>} : vector<4x32xbf16>, vector<32x128xbf16>, vector<4x128xf32> -> vector<4x128xf32>
    %149 = vector.broadcast %129 : vector<1x128xf32> to vector<4x128xf32>
    %150 = arith.addf %148, %149 : vector<4x128xf32>
    %c2_114 = arith.constant 2 : index
    %c0_115 = arith.constant 0 : index
    %c0_116 = arith.constant 0 : index
    %151 = vector.load %arg12[%c2_114, %c0_115, %c0_116] : memref<8x4x128xf32, #tpu.memory_space<vmem>>, vector<1x4x128xf32>
    %152 = vector.shape_cast %151 : vector<1x4x128xf32> to vector<4x128xf32>
    %153 = vector.shape_cast %150 : vector<4x128xf32> to vector<1x4x128xf32>
    tpu.vector_store %arg12[%c2_114, %c0_115, %c0_116], %153 {strides = array<i32>} : memref<8x4x128xf32, #tpu.memory_space<vmem>>, vector<1x4x128xf32>,
    %c12_117 = arith.constant 12 : index
    %c0_118 = arith.constant 0 : index
    %154 = vector.load %arg11[%c12_117, %c0_118] : memref<32x32xf32, #tpu.memory_space<vmem>>, vector<4x32xf32>
    %155 = arith.truncf %154 : vector<4x32xf32> to vector<4x32xbf16>
    %cst_119 = arith.constant dense<0.000000e+00> : vector<4x128xf32>
    %156 = tpu.matmul %155, %128, %cst_119 {dimension_numbers = #tpu.dot_dimension_numbers<[1], [0], [0], [1], [0, 0, 1, 1], [], []>} : vector<4x32xbf16>, vector<32x128xbf16>, vector<4x128xf32> -> vector<4x128xf32>
    %157 = vector.broadcast %129 : vector<1x128xf32> to vector<4x128xf32>
    %158 = arith.addf %156, %157 : vector<4x128xf32>
    %c3_120 = arith.constant 3 : index
    %c0_121 = arith.constant 0 : index
    %c0_122 = arith.constant 0 : index
    %159 = vector.load %arg12[%c3_120, %c0_121, %c0_122] : memref<8x4x128xf32, #tpu.memory_space<vmem>>, vector<1x4x128xf32>
    %160 = vector.shape_cast %159 : vector<1x4x128xf32> to vector<4x128xf32>
    %161 = vector.shape_cast %158 : vector<4x128xf32> to vector<1x4x128xf32>
    tpu.vector_store %arg12[%c3_120, %c0_121, %c0_122], %161 {strides = array<i32>} : memref<8x4x128xf32, #tpu.memory_space<vmem>>, vector<1x4x128xf32>,
    %c16_123 = arith.constant 16 : index
    %c0_124 = arith.constant 0 : index
    %162 = vector.load %arg11[%c16_123, %c0_124] : memref<32x32xf32, #tpu.memory_space<vmem>>, vector<4x32xf32>
    %163 = arith.truncf %162 : vector<4x32xf32> to vector<4x32xbf16>
    %cst_125 = arith.constant dense<0.000000e+00> : vector<4x128xf32>
    %164 = tpu.matmul %163, %128, %cst_125 {dimension_numbers = #tpu.dot_dimension_numbers<[1], [0], [0], [1], [0, 0, 1, 1], [], []>} : vector<4x32xbf16>, vector<32x128xbf16>, vector<4x128xf32> -> vector<4x128xf32>
    %165 = vector.broadcast %129 : vector<1x128xf32> to vector<4x128xf32>
    %166 = arith.addf %164, %165 : vector<4x128xf32>
    %c4_126 = arith.constant 4 : index
    %c0_127 = arith.constant 0 : index
    %c0_128 = arith.constant 0 : index
    %167 = vector.load %arg12[%c4_126, %c0_127, %c0_128] : memref<8x4x128xf32, #tpu.memory_space<vmem>>, vector<1x4x128xf32>
    %168 = vector.shape_cast %167 : vector<1x4x128xf32> to vector<4x128xf32>
    %169 = vector.shape_cast %166 : vector<4x128xf32> to vector<1x4x128xf32>
    tpu.vector_store %arg12[%c4_126, %c0_127, %c0_128], %169 {strides = array<i32>} : memref<8x4x128xf32, #tpu.memory_space<vmem>>, vector<1x4x128xf32>,
    %c20_129 = arith.constant 20 : index
    %c0_130 = arith.constant 0 : index
    %170 = vector.load %arg11[%c20_129, %c0_130] : memref<32x32xf32, #tpu.memory_space<vmem>>, vector<4x32xf32>
    %171 = arith.truncf %170 : vector<4x32xf32> to vector<4x32xbf16>
    %cst_131 = arith.constant dense<0.000000e+00> : vector<4x128xf32>
    %172 = tpu.matmul %171, %128, %cst_131 {dimension_numbers = #tpu.dot_dimension_numbers<[1], [0], [0], [1], [0, 0, 1, 1], [], []>} : vector<4x32xbf16>, vector<32x128xbf16>, vector<4x128xf32> -> vector<4x128xf32>
    %173 = vector.broadcast %129 : vector<1x128xf32> to vector<4x128xf32>
    %174 = arith.addf %172, %173 : vector<4x128xf32>
    %c5_132 = arith.constant 5 : index
    %c0_133 = arith.constant 0 : index
    %c0_134 = arith.constant 0 : index
    %175 = vector.load %arg12[%c5_132, %c0_133, %c0_134] : memref<8x4x128xf32, #tpu.memory_space<vmem>>, vector<1x4x128xf32>
    %176 = vector.shape_cast %175 : vector<1x4x128xf32> to vector<4x128xf32>
    %177 = vector.shape_cast %174 : vector<4x128xf32> to vector<1x4x128xf32>
    tpu.vector_store %arg12[%c5_132, %c0_133, %c0_134], %177 {strides = array<i32>} : memref<8x4x128xf32, #tpu.memory_space<vmem>>, vector<1x4x128xf32>,
    %c24_135 = arith.constant 24 : index
    %c0_136 = arith.constant 0 : index
    %178 = vector.load %arg11[%c24_135, %c0_136] : memref<32x32xf32, #tpu.memory_space<vmem>>, vector<4x32xf32>
    %179 = arith.truncf %178 : vector<4x32xf32> to vector<4x32xbf16>
    %cst_137 = arith.constant dense<0.000000e+00> : vector<4x128xf32>
    %180 = tpu.matmul %179, %128, %cst_137 {dimension_numbers = #tpu.dot_dimension_numbers<[1], [0], [0], [1], [0, 0, 1, 1], [], []>} : vector<4x32xbf16>, vector<32x128xbf16>, vector<4x128xf32> -> vector<4x128xf32>
    %181 = vector.broadcast %129 : vector<1x128xf32> to vector<4x128xf32>
    %182 = arith.addf %180, %181 : vector<4x128xf32>
    %c6_138 = arith.constant 6 : index
    %c0_139 = arith.constant 0 : index
    %c0_140 = arith.constant 0 : index
    %183 = vector.load %arg12[%c6_138, %c0_139, %c0_140] : memref<8x4x128xf32, #tpu.memory_space<vmem>>, vector<1x4x128xf32>
    %184 = vector.shape_cast %183 : vector<1x4x128xf32> to vector<4x128xf32>
    %185 = vector.shape_cast %182 : vector<4x128xf32> to vector<1x4x128xf32>
    tpu.vector_store %arg12[%c6_138, %c0_139, %c0_140], %185 {strides = array<i32>} : memref<8x4x128xf32, #tpu.memory_space<vmem>>, vector<1x4x128xf32>,
    %c28_141 = arith.constant 28 : index
    %c0_142 = arith.constant 0 : index
    %186 = vector.load %arg11[%c28_141, %c0_142] : memref<32x32xf32, #tpu.memory_space<vmem>>, vector<4x32xf32>
    %187 = arith.truncf %186 : vector<4x32xf32> to vector<4x32xbf16>
    %cst_143 = arith.constant dense<0.000000e+00> : vector<4x128xf32>
    %188 = tpu.matmul %187, %128, %cst_143 {dimension_numbers = #tpu.dot_dimension_numbers<[1], [0], [0], [1], [0, 0, 1, 1], [], []>} : vector<4x32xbf16>, vector<32x128xbf16>, vector<4x128xf32> -> vector<4x128xf32>
    %189 = vector.broadcast %129 : vector<1x128xf32> to vector<4x128xf32>
    %190 = arith.addf %188, %189 : vector<4x128xf32>
    %c7_144 = arith.constant 7 : index
    %c0_145 = arith.constant 0 : index
    %c0_146 = arith.constant 0 : index
    %191 = vector.load %arg12[%c7_144, %c0_145, %c0_146] : memref<8x4x128xf32, #tpu.memory_space<vmem>>, vector<1x4x128xf32>
    %192 = vector.shape_cast %191 : vector<1x4x128xf32> to vector<4x128xf32>
    %193 = vector.shape_cast %190 : vector<4x128xf32> to vector<1x4x128xf32>
    tpu.vector_store %arg12[%c7_144, %c0_145, %c0_146], %193 {strides = array<i32>} : memref<8x4x128xf32, #tpu.memory_space<vmem>>, vector<1x4x128xf32>,
    %c0_147 = arith.constant 0 : index
    %c0_148 = arith.constant 0 : index
    %194 = vector.load %arg3[%c0_147, %c0_148] : memref<32x128xbf16, #tpu.memory_space<vmem>>, vector<32x128xbf16>
    %cst_149 = arith.constant 0.000000e+00 : f32
    %195 = vector.broadcast %cst_149 : f32 to vector<4x32xf32>
    %cst_150 = arith.constant 0.000000e+00 : f32
    %196 = vector.broadcast %cst_150 : f32 to vector<4x32xf32>
    %c0_151 = arith.constant 0 : index
    %c0_152 = arith.constant 0 : index
    %c0_153 = arith.constant 0 : index
    %197 = vector.load %arg12[%c0_151, %c0_152, %c0_153] : memref<8x4x128xf32, #tpu.memory_space<vmem>>, vector<1x4x128xf32>
    %198 = vector.shape_cast %197 : vector<1x4x128xf32> to vector<4x128xf32>
    %199 = arith.truncf %195 : vector<4x32xf32> to vector<4x32xbf16>
    %cst_154 = arith.constant dense<0.000000e+00> : vector<4x128xf32>
    %200 = tpu.matmul %199, %194, %cst_154 {dimension_numbers = #tpu.dot_dimension_numbers<[1], [0], [0], [1], [0, 0, 1, 1], [], []>} : vector<4x32xbf16>, vector<32x128xbf16>, vector<4x128xf32> -> vector<4x128xf32>
    %201 = arith.addf %198, %200 : vector<4x128xf32>
    %202 = tpu.iota {dimensions = array<i32: 1>} : vector<4x128xi32>
    %c64_i32 = arith.constant 64 : i32
    %203 = vector.broadcast %c64_i32 : i32 to vector<4x128xi32>
    %204 = arith.cmpi sge, %202, %203 : vector<4x128xi32>
    %c96_i32 = arith.constant 96 : i32
    %205 = vector.broadcast %c96_i32 : i32 to vector<4x128xi32>
    %206 = arith.cmpi slt, %202, %205 : vector<4x128xi32>
    %207 = arith.andi %204, %206 : vector<4x128xi1>
    %208 = arith.negf %201 : vector<4x128xf32>
    %209 = math.exp %208 : vector<4x128xf32>
    %cst_155 = arith.constant 1.000000e+00 : f32
    %210 = vector.broadcast %cst_155 : f32 to vector<4x128xf32>
    %211 = arith.addf %210, %209 : vector<4x128xf32>
    %212 = arith.divf %210, %211 : vector<4x128xf32>
    %cst_156 = arith.constant 2.000000e+00 : f32
    %213 = vector.broadcast %cst_156 : f32 to vector<4x128xf32>
    %214 = arith.mulf %213, %212 : vector<4x128xf32>
    %cst_157 = arith.constant 1.000000e+00 : f32
    %215 = vector.broadcast %cst_157 : f32 to vector<4x128xf32>
    %216 = arith.subf %214, %215 : vector<4x128xf32>
    %217 = arith.select %207, %216, %212 : vector<4x128xi1>, vector<4x128xf32>
    %218 = vector.extract_strided_slice %217 {offsets = [0, 0], sizes = [4, 32], strides = [1, 1]} : vector<4x128xf32> to vector<4x32xf32>
    %219 = vector.extract_strided_slice %217 {offsets = [0, 32], sizes = [4, 32], strides = [1, 1]} : vector<4x128xf32> to vector<4x32xf32>
    %220 = vector.extract_strided_slice %217 {offsets = [0, 64], sizes = [4, 32], strides = [1, 1]} : vector<4x128xf32> to vector<4x32xf32>
    %221 = vector.extract_strided_slice %217 {offsets = [0, 96], sizes = [4, 32], strides = [1, 1]} : vector<4x128xf32> to vector<4x32xf32>
    %222 = arith.mulf %219, %196 : vector<4x32xf32>
    %223 = arith.mulf %218, %220 : vector<4x32xf32>
    %224 = arith.addf %222, %223 : vector<4x32xf32>
    %225 = math.tanh %224 : vector<4x32xf32>
    %226 = arith.mulf %221, %225 : vector<4x32xf32>
    %c1_158 = arith.constant 1 : index
    %c0_159 = arith.constant 0 : index
    %c0_160 = arith.constant 0 : index
    %227 = vector.load %arg12[%c1_158, %c0_159, %c0_160] : memref<8x4x128xf32, #tpu.memory_space<vmem>>, vector<1x4x128xf32>
    %228 = vector.shape_cast %227 : vector<1x4x128xf32> to vector<4x128xf32>
    %229 = arith.truncf %226 : vector<4x32xf32> to vector<4x32xbf16>
    %cst_161 = arith.constant dense<0.000000e+00> : vector<4x128xf32>
    %230 = tpu.matmul %229, %194, %cst_161 {dimension_numbers = #tpu.dot_dimension_numbers<[1], [0], [0], [1], [0, 0, 1, 1], [], []>} : vector<4x32xbf16>, vector<32x128xbf16>, vector<4x128xf32> -> vector<4x128xf32>
    %231 = arith.addf %228, %230 : vector<4x128xf32>
    %232 = tpu.iota {dimensions = array<i32: 1>} : vector<4x128xi32>
    %c64_i32_162 = arith.constant 64 : i32
    %233 = vector.broadcast %c64_i32_162 : i32 to vector<4x128xi32>
    %234 = arith.cmpi sge, %232, %233 : vector<4x128xi32>
    %c96_i32_163 = arith.constant 96 : i32
    %235 = vector.broadcast %c96_i32_163 : i32 to vector<4x128xi32>
    %236 = arith.cmpi slt, %232, %235 : vector<4x128xi32>
    %237 = arith.andi %234, %236 : vector<4x128xi1>
    %238 = arith.negf %231 : vector<4x128xf32>
    %239 = math.exp %238 : vector<4x128xf32>
    %cst_164 = arith.constant 1.000000e+00 : f32
    %240 = vector.broadcast %cst_164 : f32 to vector<4x128xf32>
    %241 = arith.addf %240, %239 : vector<4x128xf32>
    %242 = arith.divf %240, %241 : vector<4x128xf32>
    %cst_165 = arith.constant 2.000000e+00 : f32
    %243 = vector.broadcast %cst_165 : f32 to vector<4x128xf32>
    %244 = arith.mulf %243, %242 : vector<4x128xf32>
    %cst_166 = arith.constant 1.000000e+00 : f32
    %245 = vector.broadcast %cst_166 : f32 to vector<4x128xf32>
    %246 = arith.subf %244, %245 : vector<4x128xf32>
    %247 = arith.select %237, %246, %242 : vector<4x128xi1>, vector<4x128xf32>
    %248 = vector.extract_strided_slice %247 {offsets = [0, 0], sizes = [4, 32], strides = [1, 1]} : vector<4x128xf32> to vector<4x32xf32>
    %249 = vector.extract_strided_slice %247 {offsets = [0, 32], sizes = [4, 32], strides = [1, 1]} : vector<4x128xf32> to vector<4x32xf32>
    %250 = vector.extract_strided_slice %247 {offsets = [0, 64], sizes = [4, 32], strides = [1, 1]} : vector<4x128xf32> to vector<4x32xf32>
    %251 = vector.extract_strided_slice %247 {offsets = [0, 96], sizes = [4, 32], strides = [1, 1]} : vector<4x128xf32> to vector<4x32xf32>
    %252 = arith.mulf %249, %224 : vector<4x32xf32>
    %253 = arith.mulf %248, %250 : vector<4x32xf32>
    %254 = arith.addf %252, %253 : vector<4x32xf32>
    %255 = math.tanh %254 : vector<4x32xf32>
    %256 = arith.mulf %251, %255 : vector<4x32xf32>
    %c2_167 = arith.constant 2 : index
    %c0_168 = arith.constant 0 : index
    %c0_169 = arith.constant 0 : index
    %257 = vector.load %arg12[%c2_167, %c0_168, %c0_169] : memref<8x4x128xf32, #tpu.memory_space<vmem>>, vector<1x4x128xf32>
    %258 = vector.shape_cast %257 : vector<1x4x128xf32> to vector<4x128xf32>
    %259 = arith.truncf %256 : vector<4x32xf32> to vector<4x32xbf16>
    %cst_170 = arith.constant dense<0.000000e+00> : vector<4x128xf32>
    %260 = tpu.matmul %259, %194, %cst_170 {dimension_numbers = #tpu.dot_dimension_numbers<[1], [0], [0], [1], [0, 0, 1, 1], [], []>} : vector<4x32xbf16>, vector<32x128xbf16>, vector<4x128xf32> -> vector<4x128xf32>
    %261 = arith.addf %258, %260 : vector<4x128xf32>
    %262 = tpu.iota {dimensions = array<i32: 1>} : vector<4x128xi32>
    %c64_i32_171 = arith.constant 64 : i32
    %263 = vector.broadcast %c64_i32_171 : i32 to vector<4x128xi32>
    %264 = arith.cmpi sge, %262, %263 : vector<4x128xi32>
    %c96_i32_172 = arith.constant 96 : i32
    %265 = vector.broadcast %c96_i32_172 : i32 to vector<4x128xi32>
    %266 = arith.cmpi slt, %262, %265 : vector<4x128xi32>
    %267 = arith.andi %264, %266 : vector<4x128xi1>
    %268 = arith.negf %261 : vector<4x128xf32>
    %269 = math.exp %268 : vector<4x128xf32>
    %cst_173 = arith.constant 1.000000e+00 : f32
    %270 = vector.broadcast %cst_173 : f32 to vector<4x128xf32>
    %271 = arith.addf %270, %269 : vector<4x128xf32>
    %272 = arith.divf %270, %271 : vector<4x128xf32>
    %cst_174 = arith.constant 2.000000e+00 : f32
    %273 = vector.broadcast %cst_174 : f32 to vector<4x128xf32>
    %274 = arith.mulf %273, %272 : vector<4x128xf32>
    %cst_175 = arith.constant 1.000000e+00 : f32
    %275 = vector.broadcast %cst_175 : f32 to vector<4x128xf32>
    %276 = arith.subf %274, %275 : vector<4x128xf32>
    %277 = arith.select %267, %276, %272 : vector<4x128xi1>, vector<4x128xf32>
    %278 = vector.extract_strided_slice %277 {offsets = [0, 0], sizes = [4, 32], strides = [1, 1]} : vector<4x128xf32> to vector<4x32xf32>
    %279 = vector.extract_strided_slice %277 {offsets = [0, 32], sizes = [4, 32], strides = [1, 1]} : vector<4x128xf32> to vector<4x32xf32>
    %280 = vector.extract_strided_slice %277 {offsets = [0, 64], sizes = [4, 32], strides = [1, 1]} : vector<4x128xf32> to vector<4x32xf32>
    %281 = vector.extract_strided_slice %277 {offsets = [0, 96], sizes = [4, 32], strides = [1, 1]} : vector<4x128xf32> to vector<4x32xf32>
    %282 = arith.mulf %279, %254 : vector<4x32xf32>
    %283 = arith.mulf %278, %280 : vector<4x32xf32>
    %284 = arith.addf %282, %283 : vector<4x32xf32>
    %285 = math.tanh %284 : vector<4x32xf32>
    %286 = arith.mulf %281, %285 : vector<4x32xf32>
    %c3_176 = arith.constant 3 : index
    %c0_177 = arith.constant 0 : index
    %c0_178 = arith.constant 0 : index
    %287 = vector.load %arg12[%c3_176, %c0_177, %c0_178] : memref<8x4x128xf32, #tpu.memory_space<vmem>>, vector<1x4x128xf32>
    %288 = vector.shape_cast %287 : vector<1x4x128xf32> to vector<4x128xf32>
    %289 = arith.truncf %286 : vector<4x32xf32> to vector<4x32xbf16>
    %cst_179 = arith.constant dense<0.000000e+00> : vector<4x128xf32>
    %290 = tpu.matmul %289, %194, %cst_179 {dimension_numbers = #tpu.dot_dimension_numbers<[1], [0], [0], [1], [0, 0, 1, 1], [], []>} : vector<4x32xbf16>, vector<32x128xbf16>, vector<4x128xf32> -> vector<4x128xf32>
    %291 = arith.addf %288, %290 : vector<4x128xf32>
    %292 = tpu.iota {dimensions = array<i32: 1>} : vector<4x128xi32>
    %c64_i32_180 = arith.constant 64 : i32
    %293 = vector.broadcast %c64_i32_180 : i32 to vector<4x128xi32>
    %294 = arith.cmpi sge, %292, %293 : vector<4x128xi32>
    %c96_i32_181 = arith.constant 96 : i32
    %295 = vector.broadcast %c96_i32_181 : i32 to vector<4x128xi32>
    %296 = arith.cmpi slt, %292, %295 : vector<4x128xi32>
    %297 = arith.andi %294, %296 : vector<4x128xi1>
    %298 = arith.negf %291 : vector<4x128xf32>
    %299 = math.exp %298 : vector<4x128xf32>
    %cst_182 = arith.constant 1.000000e+00 : f32
    %300 = vector.broadcast %cst_182 : f32 to vector<4x128xf32>
    %301 = arith.addf %300, %299 : vector<4x128xf32>
    %302 = arith.divf %300, %301 : vector<4x128xf32>
    %cst_183 = arith.constant 2.000000e+00 : f32
    %303 = vector.broadcast %cst_183 : f32 to vector<4x128xf32>
    %304 = arith.mulf %303, %302 : vector<4x128xf32>
    %cst_184 = arith.constant 1.000000e+00 : f32
    %305 = vector.broadcast %cst_184 : f32 to vector<4x128xf32>
    %306 = arith.subf %304, %305 : vector<4x128xf32>
    %307 = arith.select %297, %306, %302 : vector<4x128xi1>, vector<4x128xf32>
    %308 = vector.extract_strided_slice %307 {offsets = [0, 0], sizes = [4, 32], strides = [1, 1]} : vector<4x128xf32> to vector<4x32xf32>
    %309 = vector.extract_strided_slice %307 {offsets = [0, 32], sizes = [4, 32], strides = [1, 1]} : vector<4x128xf32> to vector<4x32xf32>
    %310 = vector.extract_strided_slice %307 {offsets = [0, 64], sizes = [4, 32], strides = [1, 1]} : vector<4x128xf32> to vector<4x32xf32>
    %311 = vector.extract_strided_slice %307 {offsets = [0, 96], sizes = [4, 32], strides = [1, 1]} : vector<4x128xf32> to vector<4x32xf32>
    %312 = arith.mulf %309, %284 : vector<4x32xf32>
    %313 = arith.mulf %308, %310 : vector<4x32xf32>
    %314 = arith.addf %312, %313 : vector<4x32xf32>
    %315 = math.tanh %314 : vector<4x32xf32>
    %316 = arith.mulf %311, %315 : vector<4x32xf32>
    %c4_185 = arith.constant 4 : index
    %c0_186 = arith.constant 0 : index
    %c0_187 = arith.constant 0 : index
    %317 = vector.load %arg12[%c4_185, %c0_186, %c0_187] : memref<8x4x128xf32, #tpu.memory_space<vmem>>, vector<1x4x128xf32>
    %318 = vector.shape_cast %317 : vector<1x4x128xf32> to vector<4x128xf32>
    %319 = arith.truncf %316 : vector<4x32xf32> to vector<4x32xbf16>
    %cst_188 = arith.constant dense<0.000000e+00> : vector<4x128xf32>
    %320 = tpu.matmul %319, %194, %cst_188 {dimension_numbers = #tpu.dot_dimension_numbers<[1], [0], [0], [1], [0, 0, 1, 1], [], []>} : vector<4x32xbf16>, vector<32x128xbf16>, vector<4x128xf32> -> vector<4x128xf32>
    %321 = arith.addf %318, %320 : vector<4x128xf32>
    %322 = tpu.iota {dimensions = array<i32: 1>} : vector<4x128xi32>
    %c64_i32_189 = arith.constant 64 : i32
    %323 = vector.broadcast %c64_i32_189 : i32 to vector<4x128xi32>
    %324 = arith.cmpi sge, %322, %323 : vector<4x128xi32>
    %c96_i32_190 = arith.constant 96 : i32
    %325 = vector.broadcast %c96_i32_190 : i32 to vector<4x128xi32>
    %326 = arith.cmpi slt, %322, %325 : vector<4x128xi32>
    %327 = arith.andi %324, %326 : vector<4x128xi1>
    %328 = arith.negf %321 : vector<4x128xf32>
    %329 = math.exp %328 : vector<4x128xf32>
    %cst_191 = arith.constant 1.000000e+00 : f32
    %330 = vector.broadcast %cst_191 : f32 to vector<4x128xf32>
    %331 = arith.addf %330, %329 : vector<4x128xf32>
    %332 = arith.divf %330, %331 : vector<4x128xf32>
    %cst_192 = arith.constant 2.000000e+00 : f32
    %333 = vector.broadcast %cst_192 : f32 to vector<4x128xf32>
    %334 = arith.mulf %333, %332 : vector<4x128xf32>
    %cst_193 = arith.constant 1.000000e+00 : f32
    %335 = vector.broadcast %cst_193 : f32 to vector<4x128xf32>
    %336 = arith.subf %334, %335 : vector<4x128xf32>
    %337 = arith.select %327, %336, %332 : vector<4x128xi1>, vector<4x128xf32>
    %338 = vector.extract_strided_slice %337 {offsets = [0, 0], sizes = [4, 32], strides = [1, 1]} : vector<4x128xf32> to vector<4x32xf32>
    %339 = vector.extract_strided_slice %337 {offsets = [0, 32], sizes = [4, 32], strides = [1, 1]} : vector<4x128xf32> to vector<4x32xf32>
    %340 = vector.extract_strided_slice %337 {offsets = [0, 64], sizes = [4, 32], strides = [1, 1]} : vector<4x128xf32> to vector<4x32xf32>
    %341 = vector.extract_strided_slice %337 {offsets = [0, 96], sizes = [4, 32], strides = [1, 1]} : vector<4x128xf32> to vector<4x32xf32>
    %342 = arith.mulf %339, %314 : vector<4x32xf32>
    %343 = arith.mulf %338, %340 : vector<4x32xf32>
    %344 = arith.addf %342, %343 : vector<4x32xf32>
    %345 = math.tanh %344 : vector<4x32xf32>
    %346 = arith.mulf %341, %345 : vector<4x32xf32>
    %c5_194 = arith.constant 5 : index
    %c0_195 = arith.constant 0 : index
    %c0_196 = arith.constant 0 : index
    %347 = vector.load %arg12[%c5_194, %c0_195, %c0_196] : memref<8x4x128xf32, #tpu.memory_space<vmem>>, vector<1x4x128xf32>
    %348 = vector.shape_cast %347 : vector<1x4x128xf32> to vector<4x128xf32>
    %349 = arith.truncf %346 : vector<4x32xf32> to vector<4x32xbf16>
    %cst_197 = arith.constant dense<0.000000e+00> : vector<4x128xf32>
    %350 = tpu.matmul %349, %194, %cst_197 {dimension_numbers = #tpu.dot_dimension_numbers<[1], [0], [0], [1], [0, 0, 1, 1], [], []>} : vector<4x32xbf16>, vector<32x128xbf16>, vector<4x128xf32> -> vector<4x128xf32>
    %351 = arith.addf %348, %350 : vector<4x128xf32>
    %352 = tpu.iota {dimensions = array<i32: 1>} : vector<4x128xi32>
    %c64_i32_198 = arith.constant 64 : i32
    %353 = vector.broadcast %c64_i32_198 : i32 to vector<4x128xi32>
    %354 = arith.cmpi sge, %352, %353 : vector<4x128xi32>
    %c96_i32_199 = arith.constant 96 : i32
    %355 = vector.broadcast %c96_i32_199 : i32 to vector<4x128xi32>
    %356 = arith.cmpi slt, %352, %355 : vector<4x128xi32>
    %357 = arith.andi %354, %356 : vector<4x128xi1>
    %358 = arith.negf %351 : vector<4x128xf32>
    %359 = math.exp %358 : vector<4x128xf32>
    %cst_200 = arith.constant 1.000000e+00 : f32
    %360 = vector.broadcast %cst_200 : f32 to vector<4x128xf32>
    %361 = arith.addf %360, %359 : vector<4x128xf32>
    %362 = arith.divf %360, %361 : vector<4x128xf32>
    %cst_201 = arith.constant 2.000000e+00 : f32
    %363 = vector.broadcast %cst_201 : f32 to vector<4x128xf32>
    %364 = arith.mulf %363, %362 : vector<4x128xf32>
    %cst_202 = arith.constant 1.000000e+00 : f32
    %365 = vector.broadcast %cst_202 : f32 to vector<4x128xf32>
    %366 = arith.subf %364, %365 : vector<4x128xf32>
    %367 = arith.select %357, %366, %362 : vector<4x128xi1>, vector<4x128xf32>
    %368 = vector.extract_strided_slice %367 {offsets = [0, 0], sizes = [4, 32], strides = [1, 1]} : vector<4x128xf32> to vector<4x32xf32>
    %369 = vector.extract_strided_slice %367 {offsets = [0, 32], sizes = [4, 32], strides = [1, 1]} : vector<4x128xf32> to vector<4x32xf32>
    %370 = vector.extract_strided_slice %367 {offsets = [0, 64], sizes = [4, 32], strides = [1, 1]} : vector<4x128xf32> to vector<4x32xf32>
    %371 = vector.extract_strided_slice %367 {offsets = [0, 96], sizes = [4, 32], strides = [1, 1]} : vector<4x128xf32> to vector<4x32xf32>
    %372 = arith.mulf %369, %344 : vector<4x32xf32>
    %373 = arith.mulf %368, %370 : vector<4x32xf32>
    %374 = arith.addf %372, %373 : vector<4x32xf32>
    %375 = math.tanh %374 : vector<4x32xf32>
    %376 = arith.mulf %371, %375 : vector<4x32xf32>
    %c6_203 = arith.constant 6 : index
    %c0_204 = arith.constant 0 : index
    %c0_205 = arith.constant 0 : index
    %377 = vector.load %arg12[%c6_203, %c0_204, %c0_205] : memref<8x4x128xf32, #tpu.memory_space<vmem>>, vector<1x4x128xf32>
    %378 = vector.shape_cast %377 : vector<1x4x128xf32> to vector<4x128xf32>
    %379 = arith.truncf %376 : vector<4x32xf32> to vector<4x32xbf16>
    %cst_206 = arith.constant dense<0.000000e+00> : vector<4x128xf32>
    %380 = tpu.matmul %379, %194, %cst_206 {dimension_numbers = #tpu.dot_dimension_numbers<[1], [0], [0], [1], [0, 0, 1, 1], [], []>} : vector<4x32xbf16>, vector<32x128xbf16>, vector<4x128xf32> -> vector<4x128xf32>
    %381 = arith.addf %378, %380 : vector<4x128xf32>
    %382 = tpu.iota {dimensions = array<i32: 1>} : vector<4x128xi32>
    %c64_i32_207 = arith.constant 64 : i32
    %383 = vector.broadcast %c64_i32_207 : i32 to vector<4x128xi32>
    %384 = arith.cmpi sge, %382, %383 : vector<4x128xi32>
    %c96_i32_208 = arith.constant 96 : i32
    %385 = vector.broadcast %c96_i32_208 : i32 to vector<4x128xi32>
    %386 = arith.cmpi slt, %382, %385 : vector<4x128xi32>
    %387 = arith.andi %384, %386 : vector<4x128xi1>
    %388 = arith.negf %381 : vector<4x128xf32>
    %389 = math.exp %388 : vector<4x128xf32>
    %cst_209 = arith.constant 1.000000e+00 : f32
    %390 = vector.broadcast %cst_209 : f32 to vector<4x128xf32>
    %391 = arith.addf %390, %389 : vector<4x128xf32>
    %392 = arith.divf %390, %391 : vector<4x128xf32>
    %cst_210 = arith.constant 2.000000e+00 : f32
    %393 = vector.broadcast %cst_210 : f32 to vector<4x128xf32>
    %394 = arith.mulf %393, %392 : vector<4x128xf32>
    %cst_211 = arith.constant 1.000000e+00 : f32
    %395 = vector.broadcast %cst_211 : f32 to vector<4x128xf32>
    %396 = arith.subf %394, %395 : vector<4x128xf32>
    %397 = arith.select %387, %396, %392 : vector<4x128xi1>, vector<4x128xf32>
    %398 = vector.extract_strided_slice %397 {offsets = [0, 0], sizes = [4, 32], strides = [1, 1]} : vector<4x128xf32> to vector<4x32xf32>
    %399 = vector.extract_strided_slice %397 {offsets = [0, 32], sizes = [4, 32], strides = [1, 1]} : vector<4x128xf32> to vector<4x32xf32>
    %400 = vector.extract_strided_slice %397 {offsets = [0, 64], sizes = [4, 32], strides = [1, 1]} : vector<4x128xf32> to vector<4x32xf32>
    %401 = vector.extract_strided_slice %397 {offsets = [0, 96], sizes = [4, 32], strides = [1, 1]} : vector<4x128xf32> to vector<4x32xf32>
    %402 = arith.mulf %399, %374 : vector<4x32xf32>
    %403 = arith.mulf %398, %400 : vector<4x32xf32>
    %404 = arith.addf %402, %403 : vector<4x32xf32>
    %405 = math.tanh %404 : vector<4x32xf32>
    %406 = arith.mulf %401, %405 : vector<4x32xf32>
    %c7_212 = arith.constant 7 : index
    %c0_213 = arith.constant 0 : index
    %c0_214 = arith.constant 0 : index
    %407 = vector.load %arg12[%c7_212, %c0_213, %c0_214] : memref<8x4x128xf32, #tpu.memory_space<vmem>>, vector<1x4x128xf32>
    %408 = vector.shape_cast %407 : vector<1x4x128xf32> to vector<4x128xf32>
    %409 = arith.truncf %406 : vector<4x32xf32> to vector<4x32xbf16>
    %cst_215 = arith.constant dense<0.000000e+00> : vector<4x128xf32>
    %410 = tpu.matmul %409, %194, %cst_215 {dimension_numbers = #tpu.dot_dimension_numbers<[1], [0], [0], [1], [0, 0, 1, 1], [], []>} : vector<4x32xbf16>, vector<32x128xbf16>, vector<4x128xf32> -> vector<4x128xf32>
    %411 = arith.addf %408, %410 : vector<4x128xf32>
    %412 = tpu.iota {dimensions = array<i32: 1>} : vector<4x128xi32>
    %c64_i32_216 = arith.constant 64 : i32
    %413 = vector.broadcast %c64_i32_216 : i32 to vector<4x128xi32>
    %414 = arith.cmpi sge, %412, %413 : vector<4x128xi32>
    %c96_i32_217 = arith.constant 96 : i32
    %415 = vector.broadcast %c96_i32_217 : i32 to vector<4x128xi32>
    %416 = arith.cmpi slt, %412, %415 : vector<4x128xi32>
    %417 = arith.andi %414, %416 : vector<4x128xi1>
    %418 = arith.negf %411 : vector<4x128xf32>
    %419 = math.exp %418 : vector<4x128xf32>
    %cst_218 = arith.constant 1.000000e+00 : f32
    %420 = vector.broadcast %cst_218 : f32 to vector<4x128xf32>
    %421 = arith.addf %420, %419 : vector<4x128xf32>
    %422 = arith.divf %420, %421 : vector<4x128xf32>
    %cst_219 = arith.constant 2.000000e+00 : f32
    %423 = vector.broadcast %cst_219 : f32 to vector<4x128xf32>
    %424 = arith.mulf %423, %422 : vector<4x128xf32>
    %cst_220 = arith.constant 1.000000e+00 : f32
    %425 = vector.broadcast %cst_220 : f32 to vector<4x128xf32>
    %426 = arith.subf %424, %425 : vector<4x128xf32>
    %427 = arith.select %417, %426, %422 : vector<4x128xi1>, vector<4x128xf32>
    %428 = vector.extract_strided_slice %427 {offsets = [0, 0], sizes = [4, 32], strides = [1, 1]} : vector<4x128xf32> to vector<4x32xf32>
    %429 = vector.extract_strided_slice %427 {offsets = [0, 32], sizes = [4, 32], strides = [1, 1]} : vector<4x128xf32> to vector<4x32xf32>
    %430 = vector.extract_strided_slice %427 {offsets = [0, 64], sizes = [4, 32], strides = [1, 1]} : vector<4x128xf32> to vector<4x32xf32>
    %431 = vector.extract_strided_slice %427 {offsets = [0, 96], sizes = [4, 32], strides = [1, 1]} : vector<4x128xf32> to vector<4x32xf32>
    %432 = arith.mulf %429, %404 : vector<4x32xf32>
    %433 = arith.mulf %428, %430 : vector<4x32xf32>
    %434 = arith.addf %432, %433 : vector<4x32xf32>
    %435 = math.tanh %434 : vector<4x32xf32>
    %436 = arith.mulf %431, %435 : vector<4x32xf32>
    %c28_221 = arith.constant 28 : index
    %c0_222 = arith.constant 0 : index
    %437 = vector.load %arg11[%c28_221, %c0_222] : memref<32x32xf32, #tpu.memory_space<vmem>>, vector<4x32xf32>
    %438 = arith.truncf %437 : vector<4x32xf32> to vector<4x32xbf16>
    %c0_223 = arith.constant 0 : index
    %c0_224 = arith.constant 0 : index
    %439 = vector.load %arg5[%c0_223, %c0_224] : memref<32x128xbf16, #tpu.memory_space<vmem>>, vector<32x128xbf16>
    %cst_225 = arith.constant dense<0.000000e+00> : vector<4x128xf32>
    %440 = tpu.matmul %438, %439, %cst_225 {dimension_numbers = #tpu.dot_dimension_numbers<[1], [0], [0], [1], [0, 0, 1, 1], [], []>} : vector<4x32xbf16>, vector<32x128xbf16>, vector<4x128xf32> -> vector<4x128xf32>
    %c0_226 = arith.constant 0 : index
    %c0_227 = arith.constant 0 : index
    %441 = vector.load %arg6[%c0_226, %c0_227] : memref<1x128xf32, #tpu.memory_space<vmem>>, vector<1x128xf32>
    %442 = vector.broadcast %441 : vector<1x128xf32> to vector<4x128xf32>
    %443 = arith.addf %440, %442 : vector<4x128xf32>
    %cst_228 = arith.constant 0.000000e+00 : f32
    %444 = vector.broadcast %cst_228 : f32 to vector<4x32xf32>
    %445 = tpu.iota {dimensions = array<i32: 1>} : vector<4x128xi32>
    %c64_i32_229 = arith.constant 64 : i32
    %446 = vector.broadcast %c64_i32_229 : i32 to vector<4x128xi32>
    %447 = arith.cmpi sge, %445, %446 : vector<4x128xi32>
    %c96_i32_230 = arith.constant 96 : i32
    %448 = vector.broadcast %c96_i32_230 : i32 to vector<4x128xi32>
    %449 = arith.cmpi slt, %445, %448 : vector<4x128xi32>
    %450 = arith.andi %447, %449 : vector<4x128xi1>
    %451 = arith.negf %443 : vector<4x128xf32>
    %452 = math.exp %451 : vector<4x128xf32>
    %cst_231 = arith.constant 1.000000e+00 : f32
    %453 = vector.broadcast %cst_231 : f32 to vector<4x128xf32>
    %454 = arith.addf %453, %452 : vector<4x128xf32>
    %455 = arith.divf %453, %454 : vector<4x128xf32>
    %cst_232 = arith.constant 2.000000e+00 : f32
    %456 = vector.broadcast %cst_232 : f32 to vector<4x128xf32>
    %457 = arith.mulf %456, %455 : vector<4x128xf32>
    %cst_233 = arith.constant 1.000000e+00 : f32
    %458 = vector.broadcast %cst_233 : f32 to vector<4x128xf32>
    %459 = arith.subf %457, %458 : vector<4x128xf32>
    %460 = arith.select %450, %459, %455 : vector<4x128xi1>, vector<4x128xf32>
    %461 = vector.extract_strided_slice %460 {offsets = [0, 0], sizes = [4, 32], strides = [1, 1]} : vector<4x128xf32> to vector<4x32xf32>
    %462 = vector.extract_strided_slice %460 {offsets = [0, 32], sizes = [4, 32], strides = [1, 1]} : vector<4x128xf32> to vector<4x32xf32>
    %463 = vector.extract_strided_slice %460 {offsets = [0, 64], sizes = [4, 32], strides = [1, 1]} : vector<4x128xf32> to vector<4x32xf32>
    %464 = vector.extract_strided_slice %460 {offsets = [0, 96], sizes = [4, 32], strides = [1, 1]} : vector<4x128xf32> to vector<4x32xf32>
    %465 = arith.mulf %462, %444 : vector<4x32xf32>
    %466 = arith.mulf %461, %463 : vector<4x32xf32>
    %467 = arith.addf %465, %466 : vector<4x32xf32>
    %468 = math.tanh %467 : vector<4x32xf32>
    %469 = arith.mulf %464, %468 : vector<4x32xf32>
    %470 = arith.truncf %436 : vector<4x32xf32> to vector<4x32xbf16>
    %c0_234 = arith.constant 0 : index
    %c0_235 = arith.constant 0 : index
    %471 = vector.load %arg7[%c0_234, %c0_235] : memref<32x3xbf16, #tpu.memory_space<vmem>>, vector<32x3xbf16>
    %cst_236 = arith.constant dense<0.000000e+00> : vector<4x3xf32>
    %472 = tpu.matmul %470, %471, %cst_236 {dimension_numbers = #tpu.dot_dimension_numbers<[1], [0], [0], [1], [0, 0, 1, 1], [], []>} : vector<4x32xbf16>, vector<32x3xbf16>, vector<4x3xf32> -> vector<4x3xf32>
    %473 = arith.truncf %469 : vector<4x32xf32> to vector<4x32xbf16>
    %c0_237 = arith.constant 0 : index
    %c0_238 = arith.constant 0 : index
    %474 = vector.load %arg8[%c0_237, %c0_238] : memref<32x3xbf16, #tpu.memory_space<vmem>>, vector<32x3xbf16>
    %cst_239 = arith.constant dense<0.000000e+00> : vector<4x3xf32>
    %475 = tpu.matmul %473, %474, %cst_239 {dimension_numbers = #tpu.dot_dimension_numbers<[1], [0], [0], [1], [0, 0, 1, 1], [], []>} : vector<4x32xbf16>, vector<32x3xbf16>, vector<4x3xf32> -> vector<4x3xf32>
    %476 = arith.addf %472, %475 : vector<4x3xf32>
    %c0_240 = arith.constant 0 : index
    %c0_241 = arith.constant 0 : index
    %477 = vector.load %arg9[%c0_240, %c0_241] : memref<1x3xf32, #tpu.memory_space<vmem>>, vector<1x3xf32>
    %478 = vector.broadcast %477 : vector<1x3xf32> to vector<4x3xf32>
    %479 = arith.addf %476, %478 : vector<4x3xf32>
    %cst_242 = arith.constant dense<0xFF800000> : vector<4xf32>
    %480 = vector.multi_reduction <maximumf>, %479, %cst_242 [1] : vector<4x3xf32> to vector<4xf32>
    %481 = vector.shape_cast %480 : vector<4xf32> to vector<4x1xf32>
    %482 = vector.broadcast %481 : vector<4x1xf32> to vector<4x3xf32>
    %483 = arith.subf %479, %482 : vector<4x3xf32>
    %484 = math.exp %483 : vector<4x3xf32>
    %cst_243 = arith.constant dense<0.000000e+00> : vector<4xf32>
    %485 = vector.multi_reduction <add>, %484, %cst_243 [1] : vector<4x3xf32> to vector<4xf32>
    %486 = vector.shape_cast %485 : vector<4xf32> to vector<4x1xf32>
    %487 = math.log %486 : vector<4x1xf32>
    %488 = arith.addf %481, %487 : vector<4x1xf32>
    %489 = vector.broadcast %488 : vector<4x1xf32> to vector<4x3xf32>
    %490 = arith.subf %479, %489 : vector<4x3xf32>
    %c0_244 = arith.constant 0 : index
    %c0_245 = arith.constant 0 : index
    %491 = vector.load %arg10[%c0_244, %c0_245] : memref<4x3xf32, #tpu.memory_space<vmem>>, vector<4x3xf32>
    tpu.vector_store %arg10[%c0_244, %c0_245], %490 {strides = array<i32>} : memref<4x3xf32, #tpu.memory_space<vmem>>, vector<4x3xf32>,
    return
  }
}

</mosaic_0001>

<llo_original>
// kernel: bilstm_sentiment_forward.1
$region0: #{bilstm_sentiment_forward.1}
  #allocation0 [shape = 'u32[]', space=smem, size = 0x4, offset = 0x4, fixed_abs, tag = 'smem constant byte address 0x4 - core index']
  #allocation1 [shape = 'u32[144,128]{1,0:T(1,128)}', space=vmem, size = 0x12000, scoped, tag = 'internal scratch']
  #allocation2 [shape = 'f32[32,32]{1,0:T(8,128)}', space=vmem, size = 0x4000, scoped, tag = 'scratch operand']
  #allocation3 [shape = 'f32[8,4,128]{2,1,0:T(4,128)}', space=vmem, size = 0x4000, scoped, tag = 'scratch operand']
  %s0 = inlined_call_operand.vmem [shape: s32[32], index: 0, kind: input, shape index: {}]
  %s1 = inlined_call_operand.vmem [shape: f32[100,32], index: 1, kind: input, shape index: {}]
  %s2 = inlined_call_operand.vmem [shape: bf16[32,128], index: 2, kind: input, shape index: {}]
  %s3 = inlined_call_operand.vmem [shape: bf16[32,128], index: 3, kind: input, shape index: {}]
  %s4 = inlined_call_operand.vmem [shape: f32[1,128], index: 4, kind: input, shape index: {}]
  %s5 = inlined_call_operand.vmem [shape: bf16[32,128], index: 5, kind: input, shape index: {}]
  %s6 = inlined_call_operand.vmem [shape: f32[1,128], index: 6, kind: input, shape index: {}]
  %s7 = inlined_call_operand.vmem [shape: bf16[32,3], index: 7, kind: input, shape index: {}]
  %s8 = inlined_call_operand.vmem [shape: bf16[32,3], index: 8, kind: input, shape index: {}]
  %s9 = inlined_call_operand.vmem [shape: f32[1,3], index: 9, kind: input, shape index: {}]
  %s10 = inlined_call_operand.hbm [shape: f32[4,3], index: 10, kind: output, shape index: {}]
  %s11 = sld [smem:[#allocation0]]
  $region54: #{bilstm_sentiment_forward.1} parent=0
    _
  %s13 = ssub.s32 1, %s11
  %s14 = scalar_select 0, %s13, %s11
  $region1: #{bilstm_sentiment_forward.1} parent=0
    #allocation4 [shape = 'u8[512]{0}', space=smem, size = 0x200, scoped, tag = 'input window, operand 0, single buffered']
    #allocation5 [shape = 's32[1]{0}', space=sflag, size = 0x4, scoped, tag = 'scoped memory for bilstm_sentiment_forward.1']
    #allocation6 [shape = 's32[1]{0}', space=sflag, size = 0x4, scoped, tag = 'scoped memory for bilstm_sentiment_forward.1']
    #allocation7 [shape = 'u8[2048]{0}', space=vmem, size = 0x800, scoped, tag = 'output window, operand 0, single buffered']
    %15 = vsyncpa [#allocation6], 0
    %16 = vsyncpa [#allocation5], 0
    // Predicated region
    $region2: #{bilstm_sentiment_forward.1} parent=1 // pred_check
      _
    $region3: #{bilstm_sentiment_forward.1} parent=1 // pred_check_branch
      %18 = sbr.rel (0) target = $region5
    $region4: #{bilstm_sentiment_forward.1} parent=1 // pred_region
      %s20 = ssub.s32 16, 16
      %21 = vsyncadd [#allocation6], %s20
      %s23 = sshll.u32 %s0, 4
      %s24 = int_to_ptr.vmem [resolvable:$true] %s23
      %26 = dma.vmem_to_smem %s24, 16, [#allocation4], [#allocation6]
    $region5: #{bilstm_sentiment_forward.1} parent=1 // pred_fallthru
      _
    // Predicated region
    $region6: #{bilstm_sentiment_forward.1} parent=1 // pred_check
      _
    $region7: #{bilstm_sentiment_forward.1} parent=1 // pred_check_branch
      %28 = sbr.rel (0) target = $region9
    $region8: #{bilstm_sentiment_forward.1} parent=1 // pred_region
      _
    $region9: #{bilstm_sentiment_forward.1} parent=1 // pred_fallthru
      _
    // Predicated region
    $region10: #{bilstm_sentiment_forward.1} parent=1 // pred_check
      _
    $region11: #{bilstm_sentiment_forward.1} parent=1 // pred_check_branch
      %30 = sbr.rel (0) target = $region13
    $region12: #{bilstm_sentiment_forward.1} parent=1 // pred_region
      _
    $region13: #{bilstm_sentiment_forward.1} parent=1 // pred_fallthru
      _
    // Predicated region
    $region14: #{bilstm_sentiment_forward.1} parent=1 // pred_check
      _
    $region15: #{bilstm_sentiment_forward.1} parent=1 // pred_check_branch
      %32 = sbr.rel (0) target = $region17
    $region16: #{bilstm_sentiment_forward.1} parent=1 // pred_region
      _
    $region17: #{bilstm_sentiment_forward.1} parent=1 // pred_fallthru
      _
    // Predicated region
    $region18: #{bilstm_sentiment_forward.1} parent=1 // pred_check
      _
    $region19: #{bilstm_sentiment_forward.1} parent=1 // pred_check_branch
      %34 = sbr.rel (0) target = $region21
    $region20: #{bilstm_sentiment_forward.1} parent=1 // pred_region
      _
    $region21: #{bilstm_sentiment_forward.1} parent=1 // pred_fallthru
      _
    // Predicated region
    $region22: #{bilstm_sentiment_forward.1} parent=1 // pred_check
      _
    $region23: #{bilstm_sentiment_forward.1} parent=1 // pred_check_branch
      %36 = sbr.rel (0) target = $region25
    $region24: #{bilstm_sentiment_forward.1} parent=1 // pred_region
      _
    $region25: #{bilstm_sentiment_forward.1} parent=1 // pred_fallthru
      _
    // Predicated region
    $region26: #{bilstm_sentiment_forward.1} parent=1 // pred_check
      _
    $region27: #{bilstm_sentiment_forward.1} parent=1 // pred_check_branch
      %38 = sbr.rel (0) target = $region29
    $region28: #{bilstm_sentiment_forward.1} parent=1 // pred_region
      _
    $region29: #{bilstm_sentiment_forward.1} parent=1 // pred_fallthru
      _
    // Predicated region
    $region30: #{bilstm_sentiment_forward.1} parent=1 // pred_check
      _
    $region31: #{bilstm_sentiment_forward.1} parent=1 // pred_check_branch
      %40 = sbr.rel (0) target = $region33
    $region32: #{bilstm_sentiment_forward.1} parent=1 // pred_region
      _
    $region33: #{bilstm_sentiment_forward.1} parent=1 // pred_fallthru
      _
    // Predicated region
    $region34: #{bilstm_sentiment_forward.1} parent=1 // pred_check
      _
    $region35: #{bilstm_sentiment_forward.1} parent=1 // pred_check_branch
      %42 = sbr.rel (0) target = $region37
    $region36: #{bilstm_sentiment_forward.1} parent=1 // pred_region
      _
    $region37: #{bilstm_sentiment_forward.1} parent=1 // pred_fallthru
      _
    // Predicated region
    $region38: #{bilstm_sentiment_forward.1} parent=1 // pred_check
      _
    $region39: #{bilstm_sentiment_forward.1} parent=1 // pred_check_branch
      %44 = sbr.rel (0) target = $region41
    $region40: #{bilstm_sentiment_forward.1} parent=1 // pred_region
      _
    $region41: #{bilstm_sentiment_forward.1} parent=1 // pred_fallthru
      _
    // Predicated region
    $region42: #{bilstm_sentiment_forward.1} parent=1 // pred_check
      _
    $region43: #{bilstm_sentiment_forward.1} parent=1 // pred_check_branch
      %46 = sbr.rel (0) target = $region45
    $region44: #{bilstm_sentiment_forward.1} parent=1 // pred_region
      %47 = dma.done [#allocation6], 16
    $region45: #{bilstm_sentiment_forward.1} parent=1 // pred_fallthru
      _
    %48 = sfence
    %s50 = sld [smem:[#allocation4]]
    %s51 = scalar_lea.vmem %s1, %s50
    %v52 = vld [vmem:[%s51] sm:$0x1]
    %vm53 = vcmask 253952
    %54 = vst.msk [vmem:[#allocation2] sm:$0x1] %vm53, %v52
    %s55 = sld [smem:[#allocation4 + $0x1]]
    %s56 = scalar_lea.vmem %s1, %s55
    %v57 = vld [vmem:[%s56] sm:$0x1]
    %58 = vst.msk [vmem:[#allocation2 + $0x1] sm:$0x1] %vm53, %v57
    %s59 = sld [smem:[#allocation4 + $0x2]]
    %s60 = scalar_lea.vmem %s1, %s59
    %v61 = vld [vmem:[%s60] sm:$0x1]
    %62 = vst.msk [vmem:[#allocation2 + $0x2] sm:$0x1] %vm53, %v61
    %s63 = sld [smem:[#allocation4 + $0x3]]
    %s64 = scalar_lea.vmem %s1, %s63
    %v65 = vld [vmem:[%s64] sm:$0x1]
    %66 = vst.msk [vmem:[#allocation2 + $0x3] sm:$0x1] %vm53, %v65
    %s67 = sld [smem:[#allocation4 + $0x4]]
    %s68 = scalar_lea.vmem %s1, %s67
    %v69 = vld [vmem:[%s68] sm:$0x1]
    %70 = vst.msk [vmem:[#allocation2 + $0x4] sm:$0x1] %vm53, %v69
    %s71 = sld [smem:[#allocation4 + $0x5]]
    %s72 = scalar_lea.vmem %s1, %s71
    %v73 = vld [vmem:[%s72] sm:$0x1]
    %74 = vst.msk [vmem:[#allocation2 + $0x5] sm:$0x1] %vm53, %v73
    %s75 = sld [smem:[#allocation4 + $0x6]]
    %s76 = scalar_lea.vmem %s1, %s75
    %v77 = vld [vmem:[%s76] sm:$0x1]
    %78 = vst.msk [vmem:[#allocation2 + $0x6] sm:$0x1] %vm53, %v77
    %s79 = sld [smem:[#allocation4 + $0x7]]
    %s80 = scalar_lea.vmem %s1, %s79
    %v81 = vld [vmem:[%s80] sm:$0x1]
    %82 = vst.msk [vmem:[#allocation2 + $0x7] sm:$0x1] %vm53, %v81
    %s83 = sld [smem:[#allocation4 + $0x8]]
    %s84 = scalar_lea.vmem %s1, %s83
    %v85 = vld [vmem:[%s84] sm:$0x1]
    %86 = vst.msk [vmem:[#allocation2 + $0x8] sm:$0x1] %vm53, %v85
    %s87 = sld [smem:[#allocation4 + $0x9]]
    %s88 = scalar_lea.vmem %s1, %s87
    %v89 = vld [vmem:[%s88] sm:$0x1]
    %90 = vst.msk [vmem:[#allocation2 + $0x9] sm:$0x1] %vm53, %v89
    %s91 = sld [smem:[#allocation4 + $0xa]]
    %s92 = scalar_lea.vmem %s1, %s91
    %v93 = vld [vmem:[%s92] sm:$0x1]
    %94 = vst.msk [vmem:[#allocation2 + $0xa] sm:$0x1] %vm53, %v93
    %s95 = sld [smem:[#allocation4 + $0xb]]
    %s96 = scalar_lea.vmem %s1, %s95
    %v97 = vld [vmem:[%s96] sm:$0x1]
    %98 = vst.msk [vmem:[#allocation2 + $0xb] sm:$0x1] %vm53, %v97
    %s99 = sld [smem:[#allocation4 + $0xc]]
    %s100 = scalar_lea.vmem %s1, %s99
    %v101 = vld [vmem:[%s100] sm:$0x1]
    %102 = vst.msk [vmem:[#allocation2 + $0xc] sm:$0x1] %vm53, %v101
    %s103 = sld [smem:[#allocation4 + $0xd]]
    %s104 = scalar_lea.vmem %s1, %s103
    %v105 = vld [vmem:[%s104] sm:$0x1]
    %106 = vst.msk [vmem:[#allocation2 + $0xd] sm:$0x1] %vm53, %v105
    %s107 = sld [smem:[#allocation4 + $0xe]]
    %s108 = scalar_lea.vmem %s1, %s107
    %v109 = vld [vmem:[%s108] sm:$0x1]
    %110 = vst.msk [vmem:[#allocation2 + $0xe] sm:$0x1] %vm53, %v109
    %s111 = sld [smem:[#allocation4 + $0xf]]
    %s112 = scalar_lea.vmem %s1, %s111
    %v113 = vld [vmem:[%s112] sm:$0x1]
    %114 = vst.msk [vmem:[#allocation2 + $0xf] sm:$0x1] %vm53, %v113
    %s115 = sld [smem:[#allocation4 + $0x10]]
    %s116 = scalar_lea.vmem %s1, %s115
    %v117 = vld [vmem:[%s116] sm:$0x1]
    %118 = vst.msk [vmem:[#allocation2 + $0x10] sm:$0x1] %vm53, %v117
    %s119 = sld [smem:[#allocation4 + $0x11]]
    %s120 = scalar_lea.vmem %s1, %s119
    %v121 = vld [vmem:[%s120] sm:$0x1]
    %122 = vst.msk [vmem:[#allocation2 + $0x11] sm:$0x1] %vm53, %v121
    %s123 = sld [smem:[#allocation4 + $0x12]]
    %s124 = scalar_lea.vmem %s1, %s123
    %v125 = vld [vmem:[%s124] sm:$0x1]
    %126 = vst.msk [vmem:[#allocation2 + $0x12] sm:$0x1] %vm53, %v125
    %s127 = sld [smem:[#allocation4 + $0x13]]
    %s128 = scalar_lea.vmem %s1, %s127
    %v129 = vld [vmem:[%s128] sm:$0x1]
    %130 = vst.msk [vmem:[#allocation2 + $0x13] sm:$0x1] %vm53, %v129
    %s131 = sld [smem:[#allocation4 + $0x14]]
    %s132 = scalar_lea.vmem %s1, %s131
    %v133 = vld [vmem:[%s132] sm:$0x1]
    %134 = vst.msk [vmem:[#allocation2 + $0x14] sm:$0x1] %vm53, %v133
    %s135 = sld [smem:[#allocation4 + $0x15]]
    %s136 = scalar_lea.vmem %s1, %s135
    %v137 = vld [vmem:[%s136] sm:$0x1]
    %138 = vst.msk [vmem:[#allocation2 + $0x15] sm:$0x1] %vm53, %v137
    %s139 = sld [smem:[#allocation4 + $0x16]]
    %s140 = scalar_lea.vmem %s1, %s139
    %v141 = vld [vmem:[%s140] sm:$0x1]
    %142 = vst.msk [vmem:[#allocation2 + $0x16] sm:$0x1] %vm53, %v141
    %s143 = sld [smem:[#allocation4 + $0x17]]
    %s144 = scalar_lea.vmem %s1, %s143
    %v145 = vld [vmem:[%s144] sm:$0x1]
    %146 = vst.msk [vmem:[#allocation2 + $0x17] sm:$0x1] %vm53, %v145
    %s147 = sld [smem:[#allocation4 + $0x18]]
    %s148 = scalar_lea.vmem %s1, %s147
    %v149 = vld [vmem:[%s148] sm:$0x1]
    %150 = vst.msk [vmem:[#allocation2 + $0x18] sm:$0x1] %vm53, %v149
    %s151 = sld [smem:[#allocation4 + $0x19]]
    %s152 = scalar_lea.vmem %s1, %s151
    %v153 = vld [vmem:[%s152] sm:$0x1]
    %154 = vst.msk [vmem:[#allocation2 + $0x19] sm:$0x1] %vm53, %v153
    %s155 = sld [smem:[#allocation4 + $0x1a]]
    %s156 = scalar_lea.vmem %s1, %s155
    %v157 = vld [vmem:[%s156] sm:$0x1]
    %158 = vst.msk [vmem:[#allocation2 + $0x1a] sm:$0x1] %vm53, %v157
    %s159 = sld [smem:[#allocation4 + $0x1b]]
    %s160 = scalar_lea.vmem %s1, %s159
    %v161 = vld [vmem:[%s160] sm:$0x1]
    %162 = vst.msk [vmem:[#allocation2 + $0x1b] sm:$0x1] %vm53, %v161
    %s163 = sld [smem:[#allocation4 + $0x1c]]
    %s164 = scalar_lea.vmem %s1, %s163
    %v165 = vld [vmem:[%s164] sm:$0x1]
    %166 = vst.msk [vmem:[#allocation2 + $0x1c] sm:$0x1] %vm53, %v165
    %s167 = sld [smem:[#allocation4 + $0x1d]]
    %s168 = scalar_lea.vmem %s1, %s167
    %v169 = vld [vmem:[%s168] sm:$0x1]
    %170 = vst.msk [vmem:[#allocation2 + $0x1d] sm:$0x1] %vm53, %v169
    %s171 = sld [smem:[#allocation4 + $0x1e]]
    %s172 = scalar_lea.vmem %s1, %s171
    %v173 = vld [vmem:[%s172] sm:$0x1]
    %174 = vst.msk [vmem:[#allocation2 + $0x1e] sm:$0x1] %vm53, %v173
    %s175 = sld [smem:[#allocation4 + $0x1f]]
    %s176 = scalar_lea.vmem %s1, %s175
    %v177 = vld [vmem:[%s176] sm:$0x1]
    %178 = vst.msk [vmem:[#allocation2 + $0x1f] sm:$0x1] %vm53, %v177
    %v179 = vld [vmem:[%s2] sm:$0xf]
    %v180 = vld [vmem:[%s2 + $0x4] sm:$0xf]
    %v181 = vld [vmem:[%s2 + $0x8] sm:$0xf]
    %v182 = vld [vmem:[%s2 + $0xc] sm:$0xf]
    %v183 = vld [vmem:[%s4] sm:$0x1]
    %v184 = vld [vmem:[#allocation2] sm:$0xf]
    %v185 = vpack.c.bf16 %v184, %v184
    %v187 = vlaneseq
    %v188 = vshrl.u32 %v187, 7
    %v189 = vsub.s32 0, %v188
    %v190 = vrot.slane %v183, %v189
    %v196 = vunpack.c.l.b16 %v179
    %v197 = vunpack.c.l.b16 %v180
    %v198 = vunpack.c.l.b16 %v181
    %v199 = vunpack.c.l.b16 %v182
    %v200 = vpack.c.b16 %v197, %v196
    %v201 = vpack.c.b16 %v199, %v198
    %vm204 = vcmask 261120
    %v206 = vsel %vm204, %v185, 0
    %208 = vmatprep.subr.bf16.mxu0 0
    %209 = vmatpush1.bf16.msra.mxu0 0
    %210 = vmatprep.subr.bf16.mxu0 0
    %211 = vmatpush1.bf16.msra.mxu0 0
    %212 = vmatprep.subr.bf16.mxu0 0
    %213 = vmatpush1.bf16.msra.mxu0 0
    %214 = vmatprep.subr.bf16.mxu0 0
    %215 = vmatpush1.bf16.msra.mxu0 0
    %216 = vmatprep.subr.bf16.mxu0 0
    %217 = vmatpush1.bf16.msra.mxu0 0
    %218 = vmatprep.subr.bf16.mxu0 0
    %219 = vmatpush1.bf16.msra.mxu0 0
    %220 = vmatprep.subr.bf16.mxu0 0
    %221 = vmatpush1.bf16.msra.mxu0 %v201
    %222 = vmatprep.subr.bf16.mxu0 0
    %223 = vmatpush1.bf16.msra.mxu0 %v200
    %224 = vmatprep.subr.bf16.mxu0 0
    %225 = vmatpush2.bf16.msra.mxu0 0
    %226 = vmatprep.subr.bf16.mxu0 0
    %227 = vmatpush2.bf16.msra.mxu0 0
    %228 = vmatprep.subr.bf16.mxu0 0
    %229 = vmatpush2.bf16.msra.mxu0 0
    %230 = vmatprep.subr.bf16.mxu0 0
    %231 = vmatpush2.bf16.msra.mxu0 0
    %232 = vmatprep.subr.bf16.mxu0 0
    %233 = vmatpush2.bf16.msra.mxu0 0
    %234 = vmatprep.subr.bf16.mxu0 0
    %235 = vmatpush2.bf16.msra.mxu0 0
    %236 = vmatprep.subr.bf16.mxu0 0
    %237 = vmatpush2.bf16.msra.mxu0 0
    %238 = vmatprep.subr.bf16.mxu0 0
    %239 = vmatpush2.bf16.msra.mxu0 0
    %240 = vmatprep.mubr.bf16.mxu0 0
    %241 = vmatmul.mubr.bf16.gmra.mxu0 %v206
    %v242 = vpop.f32.mrf.mxu0
    %v243 = vadd.f32 %v190, %v242
    %v244 = vpop.f32.mrf.mxu0
    %v245 = vpop.f32.mrf.mxu0
    %v246 = vpop.f32.mrf.mxu0
    %247 = vdwg.mxu0
    %248 = vst [vmem:[#allocation3] sm:$0xf] %v243
    %v249 = vld [vmem:[#allocation2 + $0x4] sm:$0xf]
    %v250 = vpack.c.bf16 %v249, %v249
    %v252 = vsel %vm204, %v250, 0
    %254 = vmatprep.subr.bf16.mxu0 0
    %255 = vmatpush1.bf16.msra.mxu0 0
    %256 = vmatprep.subr.bf16.mxu0 0
    %257 = vmatpush1.bf16.msra.mxu0 0
    %258 = vmatprep.subr.bf16.mxu0 0
    %259 = vmatpush1.bf16.msra.mxu0 0
    %260 = vmatprep.subr.bf16.mxu0 0
    %261 = vmatpush1.bf16.msra.mxu0 0
    %262 = vmatprep.subr.bf16.mxu0 0
    %263 = vmatpush1.bf16.msra.mxu0 0
    %264 = vmatprep.subr.bf16.mxu0 0
    %265 = vmatpush1.bf16.msra.mxu0 0
    %266 = vmatprep.subr.bf16.mxu0 0
    %267 = vmatpush1.bf16.msra.mxu0 %v201
    %268 = vmatprep.subr.bf16.mxu0 0
    %269 = vmatpush1.bf16.msra.mxu0 %v200
    %270 = vmatprep.subr.bf16.mxu0 0
    %271 = vmatpush2.bf16.msra.mxu0 0
    %272 = vmatprep.subr.bf16.mxu0 0
    %273 = vmatpush2.bf16.msra.mxu0 0
    %274 = vmatprep.subr.bf16.mxu0 0
    %275 = vmatpush2.bf16.msra.mxu0 0
    %276 = vmatprep.subr.bf16.mxu0 0
    %277 = vmatpush2.bf16.msra.mxu0 0
    %278 = vmatprep.subr.bf16.mxu0 0
    %279 = vmatpush2.bf16.msra.mxu0 0
    %280 = vmatprep.subr.bf16.mxu0 0
    %281 = vmatpush2.bf16.msra.mxu0 0
    %282 = vmatprep.subr.bf16.mxu0 0
    %283 = vmatpush2.bf16.msra.mxu0 0
    %284 = vmatprep.subr.bf16.mxu0 0
    %285 = vmatpush2.bf16.msra.mxu0 0
    %286 = vmatprep.mubr.bf16.mxu0 0
    %287 = vmatmul.mubr.bf16.gmra.mxu0 %v252
    %v288 = vpop.f32.mrf.mxu0
    %v289 = vadd.f32 %v190, %v288
    %v290 = vpop.f32.mrf.mxu0
    %v291 = vpop.f32.mrf.mxu0
    %v292 = vpop.f32.mrf.mxu0
    %293 = vdwg.mxu0
    %s294 = scalar_lea.vmem [#allocation3], 4
    %295 = vst [vmem:[%s294] sm:$0xf] %v289
    %v296 = vld [vmem:[#allocation2 + $0x8] sm:$0xf]
    %v297 = vpack.c.bf16 %v296, %v296
    %v299 = vsel %vm204, %v297, 0
    %301 = vmatprep.subr.bf16.mxu0 0
    %302 = vmatpush1.bf16.msra.mxu0 0
    %303 = vmatprep.subr.bf16.mxu0 0
    %304 = vmatpush1.bf16.msra.mxu0 0
    %305 = vmatprep.subr.bf16.mxu0 0
    %306 = vmatpush1.bf16.msra.mxu0 0
    %307 = vmatprep.subr.bf16.mxu0 0
    %308 = vmatpush1.bf16.msra.mxu0 0
    %309 = vmatprep.subr.bf16.mxu0 0
    %310 = vmatpush1.bf16.msra.mxu0 0
    %311 = vmatprep.subr.bf16.mxu0 0
    %312 = vmatpush1.bf16.msra.mxu0 0
    %313 = vmatprep.subr.bf16.mxu0 0
    %314 = vmatpush1.bf16.msra.mxu0 %v201
    %315 = vmatprep.subr.bf16.mxu0 0
    %316 = vmatpush1.bf16.msra.mxu0 %v200
    %317 = vmatprep.subr.bf16.mxu0 0
    %318 = vmatpush2.bf16.msra.mxu0 0
    %319 = vmatprep.subr.bf16.mxu0 0
    %320 = vmatpush2.bf16.msra.mxu0 0
    %321 = vmatprep.subr.bf16.mxu0 0
    %322 = vmatpush2.bf16.msra.mxu0 0
    %323 = vmatprep.subr.bf16.mxu0 0
    %324 = vmatpush2.bf16.msra.mxu0 0
    %325 = vmatprep.subr.bf16.mxu0 0
    %326 = vmatpush2.bf16.msra.mxu0 0
    %327 = vmatprep.subr.bf16.mxu0 0
    %328 = vmatpush2.bf16.msra.mxu0 0
    %329 = vmatprep.subr.bf16.mxu0 0
    %330 = vmatpush2.bf16.msra.mxu0 0
    %331 = vmatprep.subr.bf16.mxu0 0
    %332 = vmatpush2.bf16.msra.mxu0 0
    %333 = vmatprep.mubr.bf16.mxu0 0
    %334 = vmatmul.mubr.bf16.gmra.mxu0 %v299
    %v335 = vpop.f32.mrf.mxu0
    %v336 = vadd.f32 %v190, %v335
    %v337 = vpop.f32.mrf.mxu0
    %v338 = vpop.f32.mrf.mxu0
    %v339 = vpop.f32.mrf.mxu0
    %340 = vdwg.mxu0
    %s341 = scalar_lea.vmem [#allocation3], 8
    %342 = vst [vmem:[%s341] sm:$0xf] %v336
    %v343 = vld [vmem:[#allocation2 + $0xc] sm:$0xf]
    %v344 = vpack.c.bf16 %v343, %v343
    %v346 = vsel %vm204, %v344, 0
    %348 = vmatprep.subr.bf16.mxu0 0
    %349 = vmatpush1.bf16.msra.mxu0 0
    %350 = vmatprep.subr.bf16.mxu0 0
    %351 = vmatpush1.bf16.msra.mxu0 0
    %352 = vmatprep.subr.bf16.mxu0 0
    %353 = vmatpush1.bf16.msra.mxu0 0
    %354 = vmatprep.subr.bf16.mxu0 0
    %355 = vmatpush1.bf16.msra.mxu0 0
    %356 = vmatprep.subr.bf16.mxu0 0
    %357 = vmatpush1.bf16.msra.mxu0 0
    %358 = vmatprep.subr.bf16.mxu0 0
    %359 = vmatpush1.bf16.msra.mxu0 0
    %360 = vmatprep.subr.bf16.mxu0 0
    %361 = vmatpush1.bf16.msra.mxu0 %v201
    %362 = vmatprep.subr.bf16.mxu0 0
    %363 = vmatpush1.bf16.msra.mxu0 %v200
    %364 = vmatprep.subr.bf16.mxu0 0
    %365 = vmatpush2.bf16.msra.mxu0 0
    %366 = vmatprep.subr.bf16.mxu0 0
    %367 = vmatpush2.bf16.msra.mxu0 0
    %368 = vmatprep.subr.bf16.mxu0 0
    %369 = vmatpush2.bf16.msra.mxu0 0
    %370 = vmatprep.subr.bf16.mxu0 0
    %371 = vmatpush2.bf16.msra.mxu0 0
    %372 = vmatprep.subr.bf16.mxu0 0
    %373 = vmatpush2.bf16.msra.mxu0 0
    %374 = vmatprep.subr.bf16.mxu0 0
    %375 = vmatpush2.bf16.msra.mxu0 0
    %376 = vmatprep.subr.bf16.mxu0 0
    %377 = vmatpush2.bf16.msra.mxu0 0
    %378 = vmatprep.subr.bf16.mxu0 0
    %379 = vmatpush2.bf16.msra.mxu0 0
    %380 = vmatprep.mubr.bf16.mxu0 0
    %381 = vmatmul.mubr.bf16.gmra.mxu0 %v346
    %v382 = vpop.f32.mrf.mxu0
    %v383 = vadd.f32 %v190, %v382
    %v384 = vpop.f32.mrf.mxu0
    %v385 = vpop.f32.mrf.mxu0
    %v386 = vpop.f32.mrf.mxu0
    %387 = vdwg.mxu0
    %s388 = scalar_lea.vmem [#allocation3], 12
    %389 = vst [vmem:[%s388] sm:$0xf] %v383
    %v390 = vld [vmem:[#allocation2 + $0x10] sm:$0xf]
    %v391 = vpack.c.bf16 %v390, %v390
    %v393 = vsel %vm204, %v391, 0
    %395 = vmatprep.subr.bf16.mxu0 0
    %396 = vmatpush1.bf16.msra.mxu0 0
    %397 = vmatprep.subr.bf16.mxu0 0
    %398 = vmatpush1.bf16.msra.mxu0 0
    %399 = vmatprep.subr.bf16.mxu0 0
    %400 = vmatpush1.bf16.msra.mxu0 0
    %401 = vmatprep.subr.bf16.mxu0 0
    %402 = vmatpush1.bf16.msra.mxu0 0
    %403 = vmatprep.subr.bf16.mxu0 0
    %404 = vmatpush1.bf16.msra.mxu0 0
    %405 = vmatprep.subr.bf16.mxu0 0
    %406 = vmatpush1.bf16.msra.mxu0 0
    %407 = vmatprep.subr.bf16.mxu0 0
    %408 = vmatpush1.bf16.msra.mxu0 %v201
    %409 = vmatprep.subr.bf16.mxu0 0
    %410 = vmatpush1.bf16.msra.mxu0 %v200
    %411 = vmatprep.subr.bf16.mxu0 0
    %412 = vmatpush2.bf16.msra.mxu0 0
    %413 = vmatprep.subr.bf16.mxu0 0
    %414 = vmatpush2.bf16.msra.mxu0 0
    %415 = vmatprep.subr.bf16.mxu0 0
    %416 = vmatpush2.bf16.msra.mxu0 0
    %417 = vmatprep.subr.bf16.mxu0 0
    %418 = vmatpush2.bf16.msra.mxu0 0
    %419 = vmatprep.subr.bf16.mxu0 0
    %420 = vmatpush2.bf16.msra.mxu0 0
    %421 = vmatprep.subr.bf16.mxu0 0
    %422 = vmatpush2.bf16.msra.mxu0 0
    %423 = vmatprep.subr.bf16.mxu0 0
    %424 = vmatpush2.bf16.msra.mxu0 0
    %425 = vmatprep.subr.bf16.mxu0 0
    %426 = vmatpush2.bf16.msra.mxu0 0
    %427 = vmatprep.mubr.bf16.mxu0 0
    %428 = vmatmul.mubr.bf16.gmra.mxu0 %v393
    %v429 = vpop.f32.mrf.mxu0
    %v430 = vadd.f32 %v190, %v429
    %v431 = vpop.f32.mrf.mxu0
    %v432 = vpop.f32.mrf.mxu0
    %v433 = vpop.f32.mrf.mxu0
    %434 = vdwg.mxu0
    %s435 = scalar_lea.vmem [#allocation3], 16
    %436 = vst [vmem:[%s435] sm:$0xf] %v430
    %v437 = vld [vmem:[#allocation2 + $0x14] sm:$0xf]
    %v438 = vpack.c.bf16 %v437, %v437
    %v440 = vsel %vm204, %v438, 0
    %442 = vmatprep.subr.bf16.mxu0 0
    %443 = vmatpush1.bf16.msra.mxu0 0
    %444 = vmatprep.subr.bf16.mxu0 0
    %445 = vmatpush1.bf16.msra.mxu0 0
    %446 = vmatprep.subr.bf16.mxu0 0
    %447 = vmatpush1.bf16.msra.mxu0 0
    %448 = vmatprep.subr.bf16.mxu0 0
    %449 = vmatpush1.bf16.msra.mxu0 0
    %450 = vmatprep.subr.bf16.mxu0 0
    %451 = vmatpush1.bf16.msra.mxu0 0
    %452 = vmatprep.subr.bf16.mxu0 0
    %453 = vmatpush1.bf16.msra.mxu0 0
    %454 = vmatprep.subr.bf16.mxu0 0
    %455 = vmatpush1.bf16.msra.mxu0 %v201
    %456 = vmatprep.subr.bf16.mxu0 0
    %457 = vmatpush1.bf16.msra.mxu0 %v200
    %458 = vmatprep.subr.bf16.mxu0 0
    %459 = vmatpush2.bf16.msra.mxu0 0
    %460 = vmatprep.subr.bf16.mxu0 0
    %461 = vmatpush2.bf16.msra.mxu0 0
    %462 = vmatprep.subr.bf16.mxu0 0
    %463 = vmatpush2.bf16.msra.mxu0 0
    %464 = vmatprep.subr.bf16.mxu0 0
    %465 = vmatpush2.bf16.msra.mxu0 0
    %466 = vmatprep.subr.bf16.mxu0 0
    %467 = vmatpush2.bf16.msra.mxu0 0
    %468 = vmatprep.subr.bf16.mxu0 0
    %469 = vmatpush2.bf16.msra.mxu0 0
    %470 = vmatprep.subr.bf16.mxu0 0
    %471 = vmatpush2.bf16.msra.mxu0 0
    %472 = vmatprep.subr.bf16.mxu0 0
    %473 = vmatpush2.bf16.msra.mxu0 0
    %474 = vmatprep.mubr.bf16.mxu0 0
    %475 = vmatmul.mubr.bf16.gmra.mxu0 %v440
    %v476 = vpop.f32.mrf.mxu0
    %v477 = vadd.f32 %v190, %v476
    %v478 = vpop.f32.mrf.mxu0
    %v479 = vpop.f32.mrf.mxu0
    %v480 = vpop.f32.mrf.mxu0
    %481 = vdwg.mxu0
    %s482 = scalar_lea.vmem [#allocation3], 20
    %483 = vst [vmem:[%s482] sm:$0xf] %v477
    %v484 = vld [vmem:[#allocation2 + $0x18] sm:$0xf]
    %v485 = vpack.c.bf16 %v484, %v484
    %v487 = vsel %vm204, %v485, 0
    %489 = vmatprep.subr.bf16.mxu0 0
    %490 = vmatpush1.bf16.msra.mxu0 0
    %491 = vmatprep.subr.bf16.mxu0 0
    %492 = vmatpush1.bf16.msra.mxu0 0
    %493 = vmatprep.subr.bf16.mxu0 0
    %494 = vmatpush1.bf16.msra.mxu0 0
    %495 = vmatprep.subr.bf16.mxu0 0
    %496 = vmatpush1.bf16.msra.mxu0 0
    %497 = vmatprep.subr.bf16.mxu0 0
    %498 = vmatpush1.bf16.msra.mxu0 0
    %499 = vmatprep.subr.bf16.mxu0 0
    %500 = vmatpush1.bf16.msra.mxu0 0
    %501 = vmatprep.subr.bf16.mxu0 0
    %502 = vmatpush1.bf16.msra.mxu0 %v201
    %503 = vmatprep.subr.bf16.mxu0 0
    %504 = vmatpush1.bf16.msra.mxu0 %v200
    %505 = vmatprep.subr.bf16.mxu0 0
    %506 = vmatpush2.bf16.msra.mxu0 0
    %507 = vmatprep.subr.bf16.mxu0 0
    %508 = vmatpush2.bf16.msra.mxu0 0
    %509 = vmatprep.subr.bf16.mxu0 0
    %510 = vmatpush2.bf16.msra.mxu0 0
    %511 = vmatprep.subr.bf16.mxu0 0
    %512 = vmatpush2.bf16.msra.mxu0 0
    %513 = vmatprep.subr.bf16.mxu0 0
    %514 = vmatpush2.bf16.msra.mxu0 0
    %515 = vmatprep.subr.bf16.mxu0 0
    %516 = vmatpush2.bf16.msra.mxu0 0
    %517 = vmatprep.subr.bf16.mxu0 0
    %518 = vmatpush2.bf16.msra.mxu0 0
    %519 = vmatprep.subr.bf16.mxu0 0
    %520 = vmatpush2.bf16.msra.mxu0 0
    %521 = vmatprep.mubr.bf16.mxu0 0
    %522 = vmatmul.mubr.bf16.gmra.mxu0 %v487
    %v523 = vpop.f32.mrf.mxu0
    %v524 = vadd.f32 %v190, %v523
    %v525 = vpop.f32.mrf.mxu0
    %v526 = vpop.f32.mrf.mxu0
    %v527 = vpop.f32.mrf.mxu0
    %528 = vdwg.mxu0
    %s529 = scalar_lea.vmem [#allocation3], 24
    %530 = vst [vmem:[%s529] sm:$0xf] %v524
    %v531 = vld [vmem:[#allocation2 + $0x1c] sm:$0xf]
    %v532 = vpack.c.bf16 %v531, %v531
    %v534 = vsel %vm204, %v532, 0
    %536 = vmatprep.subr.bf16.mxu0 0
    %537 = vmatpush1.bf16.msra.mxu0 0
    %538 = vmatprep.subr.bf16.mxu0 0
    %539 = vmatpush1.bf16.msra.mxu0 0
    %540 = vmatprep.subr.bf16.mxu0 0
    %541 = vmatpush1.bf16.msra.mxu0 0
    %542 = vmatprep.subr.bf16.mxu0 0
    %543 = vmatpush1.bf16.msra.mxu0 0
    %544 = vmatprep.subr.bf16.mxu0 0
    %545 = vmatpush1.bf16.msra.mxu0 0
    %546 = vmatprep.subr.bf16.mxu0 0
    %547 = vmatpush1.bf16.msra.mxu0 0
    %548 = vmatprep.subr.bf16.mxu0 0
    %549 = vmatpush1.bf16.msra.mxu0 %v201
    %550 = vmatprep.subr.bf16.mxu0 0
    %551 = vmatpush1.bf16.msra.mxu0 %v200
    %552 = vmatprep.subr.bf16.mxu0 0
    %553 = vmatpush2.bf16.msra.mxu0 0
    %554 = vmatprep.subr.bf16.mxu0 0
    %555 = vmatpush2.bf16.msra.mxu0 0
    %556 = vmatprep.subr.bf16.mxu0 0
    %557 = vmatpush2.bf16.msra.mxu0 0
    %558 = vmatprep.subr.bf16.mxu0 0
    %559 = vmatpush2.bf16.msra.mxu0 0
    %560 = vmatprep.subr.bf16.mxu0 0
    %561 = vmatpush2.bf16.msra.mxu0 0
    %562 = vmatprep.subr.bf16.mxu0 0
    %563 = vmatpush2.bf16.msra.mxu0 0
    %564 = vmatprep.subr.bf16.mxu0 0
    %565 = vmatpush2.bf16.msra.mxu0 0
    %566 = vmatprep.subr.bf16.mxu0 0
    %567 = vmatpush2.bf16.msra.mxu0 0
    %568 = vmatprep.mubr.bf16.mxu0 0
    %569 = vmatmul.mubr.bf16.gmra.mxu0 %v534
    %v570 = vpop.f32.mrf.mxu0
    %v571 = vadd.f32 %v190, %v570
    %v572 = vpop.f32.mrf.mxu0
    %v573 = vpop.f32.mrf.mxu0
    %v574 = vpop.f32.mrf.mxu0
    %575 = vdwg.mxu0
    %s576 = scalar_lea.vmem [#allocation3], 28
    %577 = vst [vmem:[%s576] sm:$0xf] %v571
    %v578 = vld [vmem:[%s3] sm:$0xf]
    %v579 = vld [vmem:[%s3 + $0x4] sm:$0xf]
    %v580 = vld [vmem:[%s3 + $0x8] sm:$0xf]
    %v581 = vld [vmem:[%s3 + $0xc] sm:$0xf]
    %v582 = vld [vmem:[#allocation3] sm:$0xf]
    %v587 = vunpack.c.l.b16 %v578
    %v588 = vunpack.c.l.b16 %v579
    %v589 = vunpack.c.l.b16 %v580
    %v590 = vunpack.c.l.b16 %v581
    %v591 = vpack.c.b16 %v588, %v587
    %v592 = vpack.c.b16 %v590, %v589
    %v596 = vsel %vm204, 0, 0
    %598 = vmatprep.subr.bf16.mxu0 0
    %599 = vmatpush1.bf16.msra.mxu0 0
    %600 = vmatprep.subr.bf16.mxu0 0
    %601 = vmatpush1.bf16.msra.mxu0 0
    %602 = vmatprep.subr.bf16.mxu0 0
    %603 = vmatpush1.bf16.msra.mxu0 0
    %604 = vmatprep.subr.bf16.mxu0 0
    %605 = vmatpush1.bf16.msra.mxu0 0
    %606 = vmatprep.subr.bf16.mxu0 0
    %607 = vmatpush1.bf16.msra.mxu0 0
    %608 = vmatprep.subr.bf16.mxu0 0
    %609 = vmatpush1.bf16.msra.mxu0 0
    %610 = vmatprep.subr.bf16.mxu0 0
    %611 = vmatpush1.bf16.msra.mxu0 %v592
    %612 = vmatprep.subr.bf16.mxu0 0
    %613 = vmatpush1.bf16.msra.mxu0 %v591
    %614 = vmatprep.subr.bf16.mxu0 0
    %615 = vmatpush2.bf16.msra.mxu0 0
    %616 = vmatprep.subr.bf16.mxu0 0
    %617 = vmatpush2.bf16.msra.mxu0 0
    %618 = vmatprep.subr.bf16.mxu0 0
    %619 = vmatpush2.bf16.msra.mxu0 0
    %620 = vmatprep.subr.bf16.mxu0 0
    %621 = vmatpush2.bf16.msra.mxu0 0
    %622 = vmatprep.subr.bf16.mxu0 0
    %623 = vmatpush2.bf16.msra.mxu0 0
    %624 = vmatprep.subr.bf16.mxu0 0
    %625 = vmatpush2.bf16.msra.mxu0 0
    %626 = vmatprep.subr.bf16.mxu0 0
    %627 = vmatpush2.bf16.msra.mxu0 0
    %628 = vmatprep.subr.bf16.mxu0 0
    %629 = vmatpush2.bf16.msra.mxu0 0
    %630 = vmatprep.mubr.bf16.mxu0 0
    %631 = vmatmul.mubr.bf16.gmra.mxu0 %v596
    %v632 = vpop.f32.mrf.mxu0
    %v633 = vadd.f32 0.0, %v632
    %v634 = vpop.f32.mrf.mxu0
    %v635 = vpop.f32.mrf.mxu0
    %v636 = vpop.f32.mrf.mxu0
    %637 = vdwg.mxu0
    %v638 = vadd.f32 %v582, %v633
    %v639 = vlaneseq
    %v640 = vand.u32 %v639, 127
    %vm641 = vcmp.ge.s32.totalorder %v640, 64
    %vm642 = vcmp.lt.s32.totalorder %v640, 96
    %vm643 = vmand %vm641, %vm642
    %v644 = vxor.u32 %v638, 2147483648
    %v645 = vmul.f32 %v644, 1.442695
    %v646 = vpow.pop %v645
    %v647 = vadd.f32 %v646, 1.0
    %v648 = vrcp.pop %v647
    %v649 = vmul.f32 1.0, %v648
    %v650 = vmul.f32 %v649, 2.0
    %v651 = vsub.f32 %v650, 1.0
    %v652 = vsel %vm643, %v651, %v649
    %v653 = vmul.f32 %v652, 0.0
    %655 = vrot.lane.b32.xlu0 %v652, 64
    %v656 = vpop.permute.xlu0 %655
    %v658 = vmul.f32 %v652, %v656
    %660 = vrot.lane.b32.xlu0 %v658, 32
    %v661 = vpop.permute.xlu0 %660
    %v663 = vadd.f32 %v653, %v661
    %v664 = vtanh.pop %v663
    %666 = vrot.lane.b32.xlu0 %v664, 64
    %v667 = vpop.permute.xlu0 %666
    %v669 = vmul.f32 %v652, %v667
    %v670 = vld [vmem:[%s294] sm:$0xf]
    %v671 = vpack.c.bf16 %v669, %v669
    %673 = vrot.lane.b32.xlu0 %v671, 32
    %v674 = vpop.permute.xlu0 %673
    %v676 = vsel %vm204, %v674, 0
    %678 = vmatprep.subr.bf16.mxu0 0
    %679 = vmatpush1.bf16.msra.mxu0 0
    %680 = vmatprep.subr.bf16.mxu0 0
    %681 = vmatpush1.bf16.msra.mxu0 0
    %682 = vmatprep.subr.bf16.mxu0 0
    %683 = vmatpush1.bf16.msra.mxu0 0
    %684 = vmatprep.subr.bf16.mxu0 0
    %685 = vmatpush1.bf16.msra.mxu0 0
    %686 = vmatprep.subr.bf16.mxu0 0
    %687 = vmatpush1.bf16.msra.mxu0 0
    %688 = vmatprep.subr.bf16.mxu0 0
    %689 = vmatpush1.bf16.msra.mxu0 0
    %690 = vmatprep.subr.bf16.mxu0 0
    %691 = vmatpush1.bf16.msra.mxu0 %v592
    %692 = vmatprep.subr.bf16.mxu0 0
    %693 = vmatpush1.bf16.msra.mxu0 %v591
    %694 = vmatprep.subr.bf16.mxu0 0
    %695 = vmatpush2.bf16.msra.mxu0 0
    %696 = vmatprep.subr.bf16.mxu0 0
    %697 = vmatpush2.bf16.msra.mxu0 0
    %698 = vmatprep.subr.bf16.mxu0 0
    %699 = vmatpush2.bf16.msra.mxu0 0
    %700 = vmatprep.subr.bf16.mxu0 0
    %701 = vmatpush2.bf16.msra.mxu0 0
    %702 = vmatprep.subr.bf16.mxu0 0
    %703 = vmatpush2.bf16.msra.mxu0 0
    %704 = vmatprep.subr.bf16.mxu0 0
    %705 = vmatpush2.bf16.msra.mxu0 0
    %706 = vmatprep.subr.bf16.mxu0 0
    %707 = vmatpush2.bf16.msra.mxu0 0
    %708 = vmatprep.subr.bf16.mxu0 0
    %709 = vmatpush2.bf16.msra.mxu0 0
    %710 = vmatprep.mubr.bf16.mxu0 0
    %711 = vmatmul.mubr.bf16.gmra.mxu0 %v676
    %v712 = vpop.f32.mrf.mxu0
    %v713 = vadd.f32 0.0, %v712
    %v714 = vpop.f32.mrf.mxu0
    %v715 = vpop.f32.mrf.mxu0
    %v716 = vpop.f32.mrf.mxu0
    %717 = vdwg.mxu0
    %v718 = vadd.f32 %v670, %v713
    %v719 = vxor.u32 %v718, 2147483648
    %v720 = vmul.f32 %v719, 1.442695
    %v721 = vpow.pop %v720
    %v722 = vadd.f32 %v721, 1.0
    %v723 = vrcp.pop %v722
    %v724 = vmul.f32 1.0, %v723
    %v725 = vmul.f32 %v724, 2.0
    %v726 = vsub.f32 %v725, 1.0
    %v727 = vsel %vm643, %v726, %v724
    %v728 = vmul.f32 %v727, %v663
    %730 = vrot.lane.b32.xlu0 %v727, 64
    %v731 = vpop.permute.xlu0 %730
    %v733 = vmul.f32 %v727, %v731
    %735 = vrot.lane.b32.xlu0 %v733, 32
    %v736 = vpop.permute.xlu0 %735
    %v738 = vadd.f32 %v728, %v736
    %v739 = vtanh.pop %v738
    %741 = vrot.lane.b32.xlu0 %v739, 64
    %v742 = vpop.permute.xlu0 %741
    %v744 = vmul.f32 %v727, %v742
    %v745 = vld [vmem:[%s341] sm:$0xf]
    %v746 = vpack.c.bf16 %v744, %v744
    %748 = vrot.lane.b32.xlu0 %v746, 32
    %v749 = vpop.permute.xlu0 %748
    %v751 = vsel %vm204, %v749, 0
    %753 = vmatprep.subr.bf16.mxu0 0
    %754 = vmatpush1.bf16.msra.mxu0 0
    %755 = vmatprep.subr.bf16.mxu0 0
    %756 = vmatpush1.bf16.msra.mxu0 0
    %757 = vmatprep.subr.bf16.mxu0 0
    %758 = vmatpush1.bf16.msra.mxu0 0
    %759 = vmatprep.subr.bf16.mxu0 0
    %760 = vmatpush1.bf16.msra.mxu0 0
    %761 = vmatprep.subr.bf16.mxu0 0
    %762 = vmatpush1.bf16.msra.mxu0 0
    %763 = vmatprep.subr.bf16.mxu0 0
    %764 = vmatpush1.bf16.msra.mxu0 0
    %765 = vmatprep.subr.bf16.mxu0 0
    %766 = vmatpush1.bf16.msra.mxu0 %v592
    %767 = vmatprep.subr.bf16.mxu0 0
    %768 = vmatpush1.bf16.msra.mxu0 %v591
    %769 = vmatprep.subr.bf16.mxu0 0
    %770 = vmatpush2.bf16.msra.mxu0 0
    %771 = vmatprep.subr.bf16.mxu0 0
    %772 = vmatpush2.bf16.msra.mxu0 0
    %773 = vmatprep.subr.bf16.mxu0 0
    %774 = vmatpush2.bf16.msra.mxu0 0
    %775 = vmatprep.subr.bf16.mxu0 0
    %776 = vmatpush2.bf16.msra.mxu0 0
    %777 = vmatprep.subr.bf16.mxu0 0
    %778 = vmatpush2.bf16.msra.mxu0 0
    %779 = vmatprep.subr.bf16.mxu0 0
    %780 = vmatpush2.bf16.msra.mxu0 0
    %781 = vmatprep.subr.bf16.mxu0 0
    %782 = vmatpush2.bf16.msra.mxu0 0
    %783 = vmatprep.subr.bf16.mxu0 0
    %784 = vmatpush2.bf16.msra.mxu0 0
    %785 = vmatprep.mubr.bf16.mxu0 0
    %786 = vmatmul.mubr.bf16.gmra.mxu0 %v751
    %v787 = vpop.f32.mrf.mxu0
    %v788 = vadd.f32 0.0, %v787
    %v789 = vpop.f32.mrf.mxu0
    %v790 = vpop.f32.mrf.mxu0
    %v791 = vpop.f32.mrf.mxu0
    %792 = vdwg.mxu0
    %v793 = vadd.f32 %v745, %v788
    %v794 = vxor.u32 %v793, 2147483648
    %v795 = vmul.f32 %v794, 1.442695
    %v796 = vpow.pop %v795
    %v797 = vadd.f32 %v796, 1.0
    %v798 = vrcp.pop %v797
    %v799 = vmul.f32 1.0, %v798
    %v800 = vmul.f32 %v799, 2.0
    %v801 = vsub.f32 %v800, 1.0
    %v802 = vsel %vm643, %v801, %v799
    %v803 = vmul.f32 %v802, %v738
    %805 = vrot.lane.b32.xlu0 %v802, 64
    %v806 = vpop.permute.xlu0 %805
    %v808 = vmul.f32 %v802, %v806
    %810 = vrot.lane.b32.xlu0 %v808, 32
    %v811 = vpop.permute.xlu0 %810
    %v813 = vadd.f32 %v803, %v811
    %v814 = vtanh.pop %v813
    %816 = vrot.lane.b32.xlu0 %v814, 64
    %v817 = vpop.permute.xlu0 %816
    %v819 = vmul.f32 %v802, %v817
    %v820 = vld [vmem:[%s388] sm:$0xf]
    %v821 = vpack.c.bf16 %v819, %v819
    %823 = vrot.lane.b32.xlu0 %v821, 32
    %v824 = vpop.permute.xlu0 %823
    %v826 = vsel %vm204, %v824, 0
    %828 = vmatprep.subr.bf16.mxu0 0
    %829 = vmatpush1.bf16.msra.mxu0 0
    %830 = vmatprep.subr.bf16.mxu0 0
    %831 = vmatpush1.bf16.msra.mxu0 0
    %832 = vmatprep.subr.bf16.mxu0 0
    %833 = vmatpush1.bf16.msra.mxu0 0
    %834 = vmatprep.subr.bf16.mxu0 0
    %835 = vmatpush1.bf16.msra.mxu0 0
    %836 = vmatprep.subr.bf16.mxu0 0
    %837 = vmatpush1.bf16.msra.mxu0 0
    %838 = vmatprep.subr.bf16.mxu0 0
    %839 = vmatpush1.bf16.msra.mxu0 0
    %840 = vmatprep.subr.bf16.mxu0 0
    %841 = vmatpush1.bf16.msra.mxu0 %v592
    %842 = vmatprep.subr.bf16.mxu0 0
    %843 = vmatpush1.bf16.msra.mxu0 %v591
    %844 = vmatprep.subr.bf16.mxu0 0
    %845 = vmatpush2.bf16.msra.mxu0 0
    %846 = vmatprep.subr.bf16.mxu0 0
    %847 = vmatpush2.bf16.msra.mxu0 0
    %848 = vmatprep.subr.bf16.mxu0 0
    %849 = vmatpush2.bf16.msra.mxu0 0
    %850 = vmatprep.subr.bf16.mxu0 0
    %851 = vmatpush2.bf16.msra.mxu0 0
    %852 = vmatprep.subr.bf16.mxu0 0
    %853 = vmatpush2.bf16.msra.mxu0 0
    %854 = vmatprep.subr.bf16.mxu0 0
    %855 = vmatpush2.bf16.msra.mxu0 0
    %856 = vmatprep.subr.bf16.mxu0 0
    %857 = vmatpush2.bf16.msra.mxu0 0
    %858 = vmatprep.subr.bf16.mxu0 0
    %859 = vmatpush2.bf16.msra.mxu0 0
    %860 = vmatprep.mubr.bf16.mxu0 0
    %861 = vmatmul.mubr.bf16.gmra.mxu0 %v826
    %v862 = vpop.f32.mrf.mxu0
    %v863 = vadd.f32 0.0, %v862
    %v864 = vpop.f32.mrf.mxu0
    %v865 = vpop.f32.mrf.mxu0
    %v866 = vpop.f32.mrf.mxu0
    %867 = vdwg.mxu0
    %v868 = vadd.f32 %v820, %v863
    %v869 = vxor.u32 %v868, 2147483648
    %v870 = vmul.f32 %v869, 1.442695
    %v871 = vpow.pop %v870
    %v872 = vadd.f32 %v871, 1.0
    %v873 = vrcp.pop %v872
    %v874 = vmul.f32 1.0, %v873
    %v875 = vmul.f32 %v874, 2.0
    %v876 = vsub.f32 %v875, 1.0
    %v877 = vsel %vm643, %v876, %v874
    %v878 = vmul.f32 %v877, %v813
    %880 = vrot.lane.b32.xlu0 %v877, 64
    %v881 = vpop.permute.xlu0 %880
    %v883 = vmul.f32 %v877, %v881
    %885 = vrot.lane.b32.xlu0 %v883, 32
    %v886 = vpop.permute.xlu0 %885
    %v888 = vadd.f32 %v878, %v886
    %v889 = vtanh.pop %v888
    %891 = vrot.lane.b32.xlu0 %v889, 64
    %v892 = vpop.permute.xlu0 %891
    %v894 = vmul.f32 %v877, %v892
    %v895 = vld [vmem:[%s435] sm:$0xf]
    %v896 = vpack.c.bf16 %v894, %v894
    %898 = vrot.lane.b32.xlu0 %v896, 32
    %v899 = vpop.permute.xlu0 %898
    %v901 = vsel %vm204, %v899, 0
    %903 = vmatprep.subr.bf16.mxu0 0
    %904 = vmatpush1.bf16.msra.mxu0 0
    %905 = vmatprep.subr.bf16.mxu0 0
    %906 = vmatpush1.bf16.msra.mxu0 0
    %907 = vmatprep.subr.bf16.mxu0 0
    %908 = vmatpush1.bf16.msra.mxu0 0
    %909 = vmatprep.subr.bf16.mxu0 0
    %910 = vmatpush1.bf16.msra.mxu0 0
    %911 = vmatprep.subr.bf16.mxu0 0
    %912 = vmatpush1.bf16.msra.mxu0 0
    %913 = vmatprep.subr.bf16.mxu0 0
    %914 = vmatpush1.bf16.msra.mxu0 0
    %915 = vmatprep.subr.bf16.mxu0 0
    %916 = vmatpush1.bf16.msra.mxu0 %v592
    %917 = vmatprep.subr.bf16.mxu0 0
    %918 = vmatpush1.bf16.msra.mxu0 %v591
    %919 = vmatprep.subr.bf16.mxu0 0
    %920 = vmatpush2.bf16.msra.mxu0 0
    %921 = vmatprep.subr.bf16.mxu0 0
    %922 = vmatpush2.bf16.msra.mxu0 0
    %923 = vmatprep.subr.bf16.mxu0 0
    %924 = vmatpush2.bf16.msra.mxu0 0
    %925 = vmatprep.subr.bf16.mxu0 0
    %926 = vmatpush2.bf16.msra.mxu0 0
    %927 = vmatprep.subr.bf16.mxu0 0
    %928 = vmatpush2.bf16.msra.mxu0 0
    %929 = vmatprep.subr.bf16.mxu0 0
    %930 = vmatpush2.bf16.msra.mxu0 0
    %931 = vmatprep.subr.bf16.mxu0 0
    %932 = vmatpush2.bf16.msra.mxu0 0
    %933 = vmatprep.subr.bf16.mxu0 0
    %934 = vmatpush2.bf16.msra.mxu0 0
    %935 = vmatprep.mubr.bf16.mxu0 0
    %936 = vmatmul.mubr.bf16.gmra.mxu0 %v901
    %v937 = vpop.f32.mrf.mxu0
    %v938 = vadd.f32 0.0, %v937
    %v939 = vpop.f32.mrf.mxu0
    %v940 = vpop.f32.mrf.mxu0
    %v941 = vpop.f32.mrf.mxu0
    %942 = vdwg.mxu0
    %v943 = vadd.f32 %v895, %v938
    %v944 = vxor.u32 %v943, 2147483648
    %v945 = vmul.f32 %v944, 1.442695
    %v946 = vpow.pop %v945
    %v947 = vadd.f32 %v946, 1.0
    %v948 = vrcp.pop %v947
    %v949 = vmul.f32 1.0, %v948
    %v950 = vmul.f32 %v949, 2.0
    %v951 = vsub.f32 %v950, 1.0
    %v952 = vsel %vm643, %v951, %v949
    %v953 = vmul.f32 %v952, %v888
    %955 = vrot.lane.b32.xlu0 %v952, 64
    %v956 = vpop.permute.xlu0 %955
    %v958 = vmul.f32 %v952, %v956
    %960 = vrot.lane.b32.xlu0 %v958, 32
    %v961 = vpop.permute.xlu0 %960
    %v963 = vadd.f32 %v953, %v961
    %v964 = vtanh.pop %v963
    %966 = vrot.lane.b32.xlu0 %v964, 64
    %v967 = vpop.permute.xlu0 %966
    %v969 = vmul.f32 %v952, %v967
    %v970 = vld [vmem:[%s482] sm:$0xf]
    %v971 = vpack.c.bf16 %v969, %v969
    %973 = vrot.lane.b32.xlu0 %v971, 32
    %v974 = vpop.permute.xlu0 %973
    %v976 = vsel %vm204, %v974, 0
    %978 = vmatprep.subr.bf16.mxu0 0
    %979 = vmatpush1.bf16.msra.mxu0 0
    %980 = vmatprep.subr.bf16.mxu0 0
    %981 = vmatpush1.bf16.msra.mxu0 0
    %982 = vmatprep.subr.bf16.mxu0 0
    %983 = vmatpush1.bf16.msra.mxu0 0
    %984 = vmatprep.subr.bf16.mxu0 0
    %985 = vmatpush1.bf16.msra.mxu0 0
    %986 = vmatprep.subr.bf16.mxu0 0
    %987 = vmatpush1.bf16.msra.mxu0 0
    %988 = vmatprep.subr.bf16.mxu0 0
    %989 = vmatpush1.bf16.msra.mxu0 0
    %990 = vmatprep.subr.bf16.mxu0 0
    %991 = vmatpush1.bf16.msra.mxu0 %v592
    %992 = vmatprep.subr.bf16.mxu0 0
    %993 = vmatpush1.bf16.msra.mxu0 %v591
    %994 = vmatprep.subr.bf16.mxu0 0
    %995 = vmatpush2.bf16.msra.mxu0 0
    %996 = vmatprep.subr.bf16.mxu0 0
    %997 = vmatpush2.bf16.msra.mxu0 0
    %998 = vmatprep.subr.bf16.mxu0 0
    %999 = vmatpush2.bf16.msra.mxu0 0
    %1000 = vmatprep.subr.bf16.mxu0 0
    %1001 = vmatpush2.bf16.msra.mxu0 0
    %1002 = vmatprep.subr.bf16.mxu0 0
    %1003 = vmatpush2.bf16.msra.mxu0 0
    %1004 = vmatprep.subr.bf16.mxu0 0
    %1005 = vmatpush2.bf16.msra.mxu0 0
    %1006 = vmatprep.subr.bf16.mxu0 0
    %1007 = vmatpush2.bf16.msra.mxu0 0
    %1008 = vmatprep.subr.bf16.mxu0 0
    %1009 = vmatpush2.bf16.msra.mxu0 0
    %1010 = vmatprep.mubr.bf16.mxu0 0
    %1011 = vmatmul.mubr.bf16.gmra.mxu0 %v976
    %v1012 = vpop.f32.mrf.mxu0
    %v1013 = vadd.f32 0.0, %v1012
    %v1014 = vpop.f32.mrf.mxu0
    %v1015 = vpop.f32.mrf.mxu0
    %v1016 = vpop.f32.mrf.mxu0
    %1017 = vdwg.mxu0
    %v1018 = vadd.f32 %v970, %v1013
    %v1019 = vxor.u32 %v1018, 2147483648
    %v1020 = vmul.f32 %v1019, 1.442695
    %v1021 = vpow.pop %v1020
    %v1022 = vadd.f32 %v1021, 1.0
    %v1023 = vrcp.pop %v1022
    %v1024 = vmul.f32 1.0, %v1023
    %v1025 = vmul.f32 %v1024, 2.0
    %v1026 = vsub.f32 %v1025, 1.0
    %v1027 = vsel %vm643, %v1026, %v1024
    %v1028 = vmul.f32 %v1027, %v963
    %1030 = vrot.lane.b32.xlu0 %v1027, 64
    %v1031 = vpop.permute.xlu0 %1030
    %v1033 = vmul.f32 %v1027, %v1031
    %1035 = vrot.lane.b32.xlu0 %v1033, 32
    %v1036 = vpop.permute.xlu0 %1035
    %v1038 = vadd.f32 %v1028, %v1036
    %v1039 = vtanh.pop %v1038
    %1041 = vrot.lane.b32.xlu0 %v1039, 64
    %v1042 = vpop.permute.xlu0 %1041
    %v1044 = vmul.f32 %v1027, %v1042
    %v1045 = vld [vmem:[%s529] sm:$0xf]
    %v1046 = vpack.c.bf16 %v1044, %v1044
    %1048 = vrot.lane.b32.xlu0 %v1046, 32
    %v1049 = vpop.permute.xlu0 %1048
    %v1051 = vsel %vm204, %v1049, 0
    %1053 = vmatprep.subr.bf16.mxu0 0
    %1054 = vmatpush1.bf16.msra.mxu0 0
    %1055 = vmatprep.subr.bf16.mxu0 0
    %1056 = vmatpush1.bf16.msra.mxu0 0
    %1057 = vmatprep.subr.bf16.mxu0 0
    %1058 = vmatpush1.bf16.msra.mxu0 0
    %1059 = vmatprep.subr.bf16.mxu0 0
    %1060 = vmatpush1.bf16.msra.mxu0 0
    %1061 = vmatprep.subr.bf16.mxu0 0
    %1062 = vmatpush1.bf16.msra.mxu0 0
    %1063 = vmatprep.subr.bf16.mxu0 0
    %1064 = vmatpush1.bf16.msra.mxu0 0
    %1065 = vmatprep.subr.bf16.mxu0 0
    %1066 = vmatpush1.bf16.msra.mxu0 %v592
    %1067 = vmatprep.subr.bf16.mxu0 0
    %1068 = vmatpush1.bf16.msra.mxu0 %v591
    %1069 = vmatprep.subr.bf16.mxu0 0
    %1070 = vmatpush2.bf16.msra.mxu0 0
    %1071 = vmatprep.subr.bf16.mxu0 0
    %1072 = vmatpush2.bf16.msra.mxu0 0
    %1073 = vmatprep.subr.bf16.mxu0 0
    %1074 = vmatpush2.bf16.msra.mxu0 0
    %1075 = vmatprep.subr.bf16.mxu0 0
    %1076 = vmatpush2.bf16.msra.mxu0 0
    %1077 = vmatprep.subr.bf16.mxu0 0
    %1078 = vmatpush2.bf16.msra.mxu0 0
    %1079 = vmatprep.subr.bf16.mxu0 0
    %1080 = vmatpush2.bf16.msra.mxu0 0
    %1081 = vmatprep.subr.bf16.mxu0 0
    %1082 = vmatpush2.bf16.msra.mxu0 0
    %1083 = vmatprep.subr.bf16.mxu0 0
    %1084 = vmatpush2.bf16.msra.mxu0 0
    %1085 = vmatprep.mubr.bf16.mxu0 0
    %1086 = vmatmul.mubr.bf16.gmra.mxu0 %v1051
    %v1087 = vpop.f32.mrf.mxu0
    %v1088 = vadd.f32 0.0, %v1087
    %v1089 = vpop.f32.mrf.mxu0
    %v1090 = vpop.f32.mrf.mxu0
    %v1091 = vpop.f32.mrf.mxu0
    %1092 = vdwg.mxu0
    %v1093 = vadd.f32 %v1045, %v1088
    %v1094 = vxor.u32 %v1093, 2147483648
    %v1095 = vmul.f32 %v1094, 1.442695
    %v1096 = vpow.pop %v1095
    %v1097 = vadd.f32 %v1096, 1.0
    %v1098 = vrcp.pop %v1097
    %v1099 = vmul.f32 1.0, %v1098
    %v1100 = vmul.f32 %v1099, 2.0
    %v1101 = vsub.f32 %v1100, 1.0
    %v1102 = vsel %vm643, %v1101, %v1099
    %v1103 = vmul.f32 %v1102, %v1038
    %1105 = vrot.lane.b32.xlu0 %v1102, 64
    %v1106 = vpop.permute.xlu0 %1105
    %v1108 = vmul.f32 %v1102, %v1106
    %1110 = vrot.lane.b32.xlu0 %v1108, 32
    %v1111 = vpop.permute.xlu0 %1110
    %v1113 = vadd.f32 %v1103, %v1111
    %v1114 = vtanh.pop %v1113
    %1116 = vrot.lane.b32.xlu0 %v1114, 64
    %v1117 = vpop.permute.xlu0 %1116
    %v1119 = vmul.f32 %v1102, %v1117
    %v1120 = vld [vmem:[%s576] sm:$0xf]
    %v1121 = vpack.c.bf16 %v1119, %v1119
    %1123 = vrot.lane.b32.xlu0 %v1121, 32
    %v1124 = vpop.permute.xlu0 %1123
    %v1126 = vsel %vm204, %v1124, 0
    %1128 = vmatprep.subr.bf16.mxu0 0
    %1129 = vmatpush1.bf16.msra.mxu0 0
    %1130 = vmatprep.subr.bf16.mxu0 0
    %1131 = vmatpush1.bf16.msra.mxu0 0
    %1132 = vmatprep.subr.bf16.mxu0 0
    %1133 = vmatpush1.bf16.msra.mxu0 0
    %1134 = vmatprep.subr.bf16.mxu0 0
    %1135 = vmatpush1.bf16.msra.mxu0 0
    %1136 = vmatprep.subr.bf16.mxu0 0
    %1137 = vmatpush1.bf16.msra.mxu0 0
    %1138 = vmatprep.subr.bf16.mxu0 0
    %1139 = vmatpush1.bf16.msra.mxu0 0
    %1140 = vmatprep.subr.bf16.mxu0 0
    %1141 = vmatpush1.bf16.msra.mxu0 %v592
    %1142 = vmatprep.subr.bf16.mxu0 0
    %1143 = vmatpush1.bf16.msra.mxu0 %v591
    %1144 = vmatprep.subr.bf16.mxu0 0
    %1145 = vmatpush2.bf16.msra.mxu0 0
    %1146 = vmatprep.subr.bf16.mxu0 0
    %1147 = vmatpush2.bf16.msra.mxu0 0
    %1148 = vmatprep.subr.bf16.mxu0 0
    %1149 = vmatpush2.bf16.msra.mxu0 0
    %1150 = vmatprep.subr.bf16.mxu0 0
    %1151 = vmatpush2.bf16.msra.mxu0 0
    %1152 = vmatprep.subr.bf16.mxu0 0
    %1153 = vmatpush2.bf16.msra.mxu0 0
    %1154 = vmatprep.subr.bf16.mxu0 0
    %1155 = vmatpush2.bf16.msra.mxu0 0
    %1156 = vmatprep.subr.bf16.mxu0 0
    %1157 = vmatpush2.bf16.msra.mxu0 0
    %1158 = vmatprep.subr.bf16.mxu0 0
    %1159 = vmatpush2.bf16.msra.mxu0 0
    %1160 = vmatprep.mubr.bf16.mxu0 0
    %1161 = vmatmul.mubr.bf16.gmra.mxu0 %v1126
    %v1162 = vpop.f32.mrf.mxu0
    %v1163 = vadd.f32 0.0, %v1162
    %v1164 = vpop.f32.mrf.mxu0
    %v1165 = vpop.f32.mrf.mxu0
    %v1166 = vpop.f32.mrf.mxu0
    %1167 = vdwg.mxu0
    %v1168 = vadd.f32 %v1120, %v1163
    %v1169 = vxor.u32 %v1168, 2147483648
    %v1170 = vmul.f32 %v1169, 1.442695
    %v1171 = vpow.pop %v1170
    %v1172 = vadd.f32 %v1171, 1.0
    %v1173 = vrcp.pop %v1172
    %v1174 = vmul.f32 1.0, %v1173
    %v1175 = vmul.f32 %v1174, 2.0
    %v1176 = vsub.f32 %v1175, 1.0
    %v1177 = vsel %vm643, %v1176, %v1174
    %v1178 = vmul.f32 %v1177, %v1113
    %1180 = vrot.lane.b32.xlu0 %v1177, 64
    %v1181 = vpop.permute.xlu0 %1180
    %v1183 = vmul.f32 %v1177, %v1181
    %1185 = vrot.lane.b32.xlu0 %v1183, 32
    %v1186 = vpop.permute.xlu0 %1185
    %v1188 = vadd.f32 %v1178, %v1186
    %v1189 = vtanh.pop %v1188
    %1191 = vrot.lane.b32.xlu0 %v1189, 64
    %v1192 = vpop.permute.xlu0 %1191
    %v1194 = vmul.f32 %v1177, %v1192
    %v1195 = vld [vmem:[#allocation2 + $0x1c] sm:$0xf]
    %v1196 = vpack.c.bf16 %v1195, %v1195
    %v1197 = vld [vmem:[%s5] sm:$0xf]
    %v1198 = vld [vmem:[%s5 + $0x4] sm:$0xf]
    %v1199 = vld [vmem:[%s5 + $0x8] sm:$0xf]
    %v1200 = vld [vmem:[%s5 + $0xc] sm:$0xf]
    %v1201 = vld [vmem:[%s6] sm:$0x1]
    %v1203 = vlaneseq
    %v1204 = vshrl.u32 %v1203, 7
    %v1205 = vsub.s32 0, %v1204
    %v1206 = vrot.slane %v1201, %v1205
    %v1212 = vunpack.c.l.b16 %v1197
    %v1213 = vunpack.c.l.b16 %v1198
    %v1214 = vunpack.c.l.b16 %v1199
    %v1215 = vunpack.c.l.b16 %v1200
    %v1216 = vpack.c.b16 %v1213, %v1212
    %v1217 = vpack.c.b16 %v1215, %v1214
    %v1221 = vsel %vm204, %v1196, 0
    %1223 = vmatprep.subr.bf16.mxu0 0
    %1224 = vmatpush1.bf16.msra.mxu0 0
    %1225 = vmatprep.subr.bf16.mxu0 0
    %1226 = vmatpush1.bf16.msra.mxu0 0
    %1227 = vmatprep.subr.bf16.mxu0 0
    %1228 = vmatpush1.bf16.msra.mxu0 0
    %1229 = vmatprep.subr.bf16.mxu0 0
    %1230 = vmatpush1.bf16.msra.mxu0 0
    %1231 = vmatprep.subr.bf16.mxu0 0
    %1232 = vmatpush1.bf16.msra.mxu0 0
    %1233 = vmatprep.subr.bf16.mxu0 0
    %1234 = vmatpush1.bf16.msra.mxu0 0
    %1235 = vmatprep.subr.bf16.mxu0 0
    %1236 = vmatpush1.bf16.msra.mxu0 %v1217
    %1237 = vmatprep.subr.bf16.mxu0 0
    %1238 = vmatpush1.bf16.msra.mxu0 %v1216
    %1239 = vmatprep.subr.bf16.mxu0 0
    %1240 = vmatpush2.bf16.msra.mxu0 0
    %1241 = vmatprep.subr.bf16.mxu0 0
    %1242 = vmatpush2.bf16.msra.mxu0 0
    %1243 = vmatprep.subr.bf16.mxu0 0
    %1244 = vmatpush2.bf16.msra.mxu0 0
    %1245 = vmatprep.subr.bf16.mxu0 0
    %1246 = vmatpush2.bf16.msra.mxu0 0
    %1247 = vmatprep.subr.bf16.mxu0 0
    %1248 = vmatpush2.bf16.msra.mxu0 0
    %1249 = vmatprep.subr.bf16.mxu0 0
    %1250 = vmatpush2.bf16.msra.mxu0 0
    %1251 = vmatprep.subr.bf16.mxu0 0
    %1252 = vmatpush2.bf16.msra.mxu0 0
    %1253 = vmatprep.subr.bf16.mxu0 0
    %1254 = vmatpush2.bf16.msra.mxu0 0
    %1255 = vmatprep.mubr.bf16.mxu0 0
    %1256 = vmatmul.mubr.bf16.gmra.mxu0 %v1221
    %v1257 = vpop.f32.mrf.mxu0
    %v1258 = vadd.f32 %v1206, %v1257
    %v1259 = vpop.f32.mrf.mxu0
    %v1260 = vpop.f32.mrf.mxu0
    %v1261 = vpop.f32.mrf.mxu0
    %1262 = vdwg.mxu0
    %v1263 = vxor.u32 %v1258, 2147483648
    %v1264 = vmul.f32 %v1263, 1.442695
    %v1265 = vpow.pop %v1264
    %v1266 = vadd.f32 %v1265, 1.0
    %v1267 = vrcp.pop %v1266
    %v1268 = vmul.f32 1.0, %v1267
    %v1269 = vmul.f32 %v1268, 2.0
    %v1270 = vsub.f32 %v1269, 1.0
    %v1271 = vsel %vm643, %v1270, %v1268
    %v1272 = vmul.f32 %v1271, 0.0
    %1274 = vrot.lane.b32.xlu0 %v1271, 64
    %v1275 = vpop.permute.xlu0 %1274
    %v1277 = vmul.f32 %v1271, %v1275
    %1279 = vrot.lane.b32.xlu0 %v1277, 32
    %v1280 = vpop.permute.xlu0 %1279
    %v1282 = vadd.f32 %v1272, %v1280
    %v1283 = vtanh.pop %v1282
    %1285 = vrot.lane.b32.xlu0 %v1283, 64
    %v1286 = vpop.permute.xlu0 %1285
    %v1288 = vmul.f32 %v1271, %v1286
    %v1289 = vpack.c.bf16 %v1194, %v1194
    %v1290 = vld [vmem:[%s7] sm:$0xf]
    %v1291 = vld [vmem:[%s7 + $0x4] sm:$0xf]
    %v1292 = vld [vmem:[%s7 + $0x8] sm:$0xf]
    %v1293 = vld [vmem:[%s7 + $0xc] sm:$0xf]
    %v1294 = vpack.c.bf16 %v1288, %v1288
    %v1295 = vld [vmem:[%s8] sm:$0xf]
    %v1296 = vld [vmem:[%s8 + $0x4] sm:$0xf]
    %v1297 = vld [vmem:[%s8 + $0x8] sm:$0xf]
    %v1298 = vld [vmem:[%s8 + $0xc] sm:$0xf]
    %1300 = vrot.lane.b32.xlu0 %v1294, 32
    %v1301 = vpop.permute.xlu0 %1300
    %v1306 = vunpack.c.l.b16 %v1295
    %v1307 = vunpack.c.l.b16 %v1296
    %v1308 = vunpack.c.l.b16 %v1297
    %v1309 = vunpack.c.l.b16 %v1298
    %v1310 = vpack.c.b16 %v1307, %v1306
    %v1311 = vpack.c.b16 %v1309, %v1308
    %v1315 = vsel %vm204, %v1301, 0
    %1317 = vmatprep.subr.bf16.mxu0 0
    %1318 = vmatpush1.bf16.msra.mxu0 0
    %1319 = vmatprep.subr.bf16.mxu0 0
    %1320 = vmatpush1.bf16.msra.mxu0 0
    %1321 = vmatprep.subr.bf16.mxu0 0
    %1322 = vmatpush1.bf16.msra.mxu0 0
    %1323 = vmatprep.subr.bf16.mxu0 0
    %1324 = vmatpush1.bf16.msra.mxu0 0
    %1325 = vmatprep.subr.bf16.mxu0 0
    %1326 = vmatpush1.bf16.msra.mxu0 0
    %1327 = vmatprep.subr.bf16.mxu0 0
    %1328 = vmatpush1.bf16.msra.mxu0 0
    %1329 = vmatprep.subr.bf16.mxu0 0
    %1330 = vmatpush1.bf16.msra.mxu0 %v1311
    %1331 = vmatprep.subr.bf16.mxu0 0
    %1332 = vmatpush1.bf16.msra.mxu0 %v1310
    %1333 = vmatprep.subr.bf16.mxu0 0
    %1334 = vmatpush2.bf16.msra.mxu0 0
    %1335 = vmatprep.subr.bf16.mxu0 0
    %1336 = vmatpush2.bf16.msra.mxu0 0
    %1337 = vmatprep.subr.bf16.mxu0 0
    %1338 = vmatpush2.bf16.msra.mxu0 0
    %1339 = vmatprep.subr.bf16.mxu0 0
    %1340 = vmatpush2.bf16.msra.mxu0 0
    %1341 = vmatprep.subr.bf16.mxu0 0
    %1342 = vmatpush2.bf16.msra.mxu0 0
    %1343 = vmatprep.subr.bf16.mxu0 0
    %1344 = vmatpush2.bf16.msra.mxu0 0
    %1345 = vmatprep.subr.bf16.mxu0 0
    %1346 = vmatpush2.bf16.msra.mxu0 0
    %1347 = vmatprep.subr.bf16.mxu0 0
    %1348 = vmatpush2.bf16.msra.mxu0 0
    %1349 = vmatprep.mubr.bf16.mxu0 0
    %1350 = vmatmul.mubr.bf16.gmra.mxu0 %v1315
    %v1351 = vpop.f32.mrf.mxu0
    %v1352 = vadd.f32 0.0, %v1351
    %v1353 = vpop.f32.mrf.mxu0
    %v1354 = vpop.f32.mrf.mxu0
    %v1355 = vpop.f32.mrf.mxu0
    %1356 = vdwg.mxu0
    %1358 = vrot.lane.b32.xlu0 %v1289, 32
    %v1359 = vpop.permute.xlu0 %1358
    %v1364 = vunpack.c.l.b16 %v1290
    %v1365 = vunpack.c.l.b16 %v1291
    %v1366 = vunpack.c.l.b16 %v1292
    %v1367 = vunpack.c.l.b16 %v1293
    %v1368 = vpack.c.b16 %v1365, %v1364
    %v1369 = vpack.c.b16 %v1367, %v1366
    %v1373 = vsel %vm204, %v1359, 0
    %1375 = vmatprep.subr.bf16.mxu0 0
    %1376 = vmatpush1.bf16.msra.mxu0 0
    %1377 = vmatprep.subr.bf16.mxu0 0
    %1378 = vmatpush1.bf16.msra.mxu0 0
    %1379 = vmatprep.subr.bf16.mxu0 0
    %1380 = vmatpush1.bf16.msra.mxu0 0
    %1381 = vmatprep.subr.bf16.mxu0 0
    %1382 = vmatpush1.bf16.msra.mxu0 0
    %1383 = vmatprep.subr.bf16.mxu0 0
    %1384 = vmatpush1.bf16.msra.mxu0 0
    %1385 = vmatprep.subr.bf16.mxu0 0
    %1386 = vmatpush1.bf16.msra.mxu0 0
    %1387 = vmatprep.subr.bf16.mxu0 0
    %1388 = vmatpush1.bf16.msra.mxu0 %v1369
    %1389 = vmatprep.subr.bf16.mxu0 0
    %1390 = vmatpush1.bf16.msra.mxu0 %v1368
    %1391 = vmatprep.subr.bf16.mxu0 0
    %1392 = vmatpush2.bf16.msra.mxu0 0
    %1393 = vmatprep.subr.bf16.mxu0 0
    %1394 = vmatpush2.bf16.msra.mxu0 0
    %1395 = vmatprep.subr.bf16.mxu0 0
    %1396 = vmatpush2.bf16.msra.mxu0 0
    %1397 = vmatprep.subr.bf16.mxu0 0
    %1398 = vmatpush2.bf16.msra.mxu0 0
    %1399 = vmatprep.subr.bf16.mxu0 0
    %1400 = vmatpush2.bf16.msra.mxu0 0
    %1401 = vmatprep.subr.bf16.mxu0 0
    %1402 = vmatpush2.bf16.msra.mxu0 0
    %1403 = vmatprep.subr.bf16.mxu0 0
    %1404 = vmatpush2.bf16.msra.mxu0 0
    %1405 = vmatprep.subr.bf16.mxu0 0
    %1406 = vmatpush2.bf16.msra.mxu0 0
    %1407 = vmatprep.mubr.bf16.mxu0 0
    %1408 = vmatmul.mubr.bf16.gmra.mxu0 %v1373
    %v1409 = vpop.f32.mrf.mxu0
    %v1410 = vadd.f32 %v1352, %v1409
    %v1411 = vpop.f32.mrf.mxu0
    %v1412 = vpop.f32.mrf.mxu0
    %v1413 = vpop.f32.mrf.mxu0
    %1414 = vdwg.mxu0
    %v1415 = vld [vmem:[%s9] sm:$0x1]
    %v1417 = vlaneseq
    %v1418 = vshrl.u32 %v1417, 7
    %v1419 = vsub.s32 0, %v1418
    %v1420 = vrot.slane %v1415, %v1419
    %v1422 = vadd.f32 %v1410, %v1420
    %vm1423 = vcmask 19456
    %v1424 = vsel %vm1423, %v1422, -inf
    %1425 = vmax.xlane.f32.xlu0 %v1424
    %v1426 = vpop.xlane.xlu0 %1425
    %v1427 = vsub.f32 %v1422, %v1426
    %v1428 = vmul.f32 %v1427, 1.442695
    %v1429 = vpow.pop %v1428
    %v1430 = vsel %vm1423, %v1429, 0.0
    %1431 = vadd.xlane.f32.xlu0 %v1430
    %v1432 = vpop.xlane.xlu0 %1431
    %v1433 = vlog2.pop %v1432
    %v1434 = vmul.f32 %v1433, 0.6931472
    %v1435 = vadd.f32 %v1426, %v1434
    %v1436 = vsub.f32 %v1422, %v1435
    %1437 = vst.msk [vmem:[#allocation7] sm:$0xf] %vm1423, %v1436
    // Predicated region
    $region46: #{bilstm_sentiment_forward.1} parent=1 // pred_check
      _
    $region47: #{bilstm_sentiment_forward.1} parent=1 // pred_check_branch
      %1439 = sbr.rel (0) target = $region49
    $region48: #{bilstm_sentiment_forward.1} parent=1 // pred_region
      %s1441 = ssub.s32 64, 64
      %1442 = vsyncadd [#allocation5], %s1441
      %s1444 = sshll.u32 [#allocation7], 4
      %s1445 = int_to_ptr.vmem [resolvable:$true] %s1444
      %1447 = dma.vmem_to_hbm [thread:$0]  %s1445, 64, %s10, [#allocation5]
    $region49: #{bilstm_sentiment_forward.1} parent=1 // pred_fallthru
      _
    // Predicated region
    $region50: #{bilstm_sentiment_forward.1} parent=1 // pred_check
      _
    $region51: #{bilstm_sentiment_forward.1} parent=1 // pred_check_branch
      %1449 = sbr.rel (0) target = $region53
    $region52: #{bilstm_sentiment_forward.1} parent=1 // pred_region
      %1450 = dma.done [#allocation5], 64
    $region53: #{bilstm_sentiment_forward.1} parent=1 // pred_fallthru
      _
    %1451 = vsyncpa [#allocation5], 1
    %1452 = vsyncpa [#allocation6], 1

</llo_original>
